<compile_context>
chip_gen: v5e
topology: v5e:2x2
jax: 0.10.0
libtpu: 0.0.40
codegen_flags: <defaults>
</compile_context>

<pallas_src>
import functools

import jax
import jax.numpy as jnp
import numpy as np
from jax.experimental import pallas as pl
from jax.experimental.pallas import tpu as pltpu


def _round_up(x, m):
    return (x + m - 1) // m * m


# --------------------------------------------------------------------------
# Kernel 1: encoder (streams x and wq0 over item tiles) + small mid layers.
# --------------------------------------------------------------------------
def _encoder_kernel(x_ref, wq0_ref, bq0_ref, wq1m_ref, wq1v_ref,
                    bq1m_ref, bq1v_ref, wp0_ref, bp0_ref,
                    muv_ref, d_ref,
                    s_acc, n_acc):
    k = pl.program_id(1)

    @pl.when(k == 0)
    def _init():
        s_acc[...] = jnp.zeros_like(s_acc)
        n_acc[...] = jnp.zeros_like(n_acc)

    x = x_ref[...]  # (tb, ti) f32
    # Deferred L2 normalization: accumulate x @ W and sum(x^2) over item tiles
    # (zero-padded columns contribute exactly 0 to both).
    s_acc[...] += jnp.dot(x.astype(wq0_ref.dtype), wq0_ref[...],
                          preferred_element_type=jnp.float32)
    n_acc[...] += jnp.sum(x * x, axis=1, keepdims=True)

    @pl.when(k == pl.num_programs(1) - 1)
    def _finalize():
        # (x / max(||x||, 1e-12)) @ W == (x @ W) * rsqrt(max(||x||^2, 1e-24))
        inv_norm = jax.lax.rsqrt(jnp.maximum(n_acc[...], 1e-24))
        h1 = jnp.tanh(s_acc[...] * inv_norm + bq0_ref[...])
        mu = jnp.dot(h1, wq1m_ref[...],
                     preferred_element_type=jnp.float32) + bq1m_ref[...]
        logvar = jnp.dot(h1, wq1v_ref[...],
                         preferred_element_type=jnp.float32) + bq1v_ref[...]
        # Lane-dense [tb, 2*latent] output slab; split back in the wrapper.
        muv_ref[...] = jnp.concatenate([mu, logvar], axis=-1)
        # reparameterize (eval mode): z = mu; first decoder layer.
        d = jnp.tanh(jnp.dot(mu, wp0_ref[...],
                             preferred_element_type=jnp.float32) + bp0_ref[...])
        d_ref[...] = d.astype(d_ref.dtype)


# --------------------------------------------------------------------------
# Kernel 2: decoder output layer (streams wp1 / bp1 over item tiles).
# --------------------------------------------------------------------------
def _decoder_kernel(d_ref, wp1_ref, bp1_ref, out_ref):
    out_ref[...] = (jnp.dot(d_ref[...], wp1_ref[...],
                            preferred_element_type=jnp.float32)
                    + bp1_ref[...]).astype(out_ref.dtype)


# --------------------------------------------------------------------------
# Wrapper
# --------------------------------------------------------------------------
def multivae_forward(x, params, *, tile_b=128, tile_items=512,
                     stream_dtype=jnp.bfloat16):
    """Eval-mode forward. Weights are pre-transposed [in, out]; wq1/bq1 are
    packed [hidden, 2*latent] exactly like the PyTorch module."""
    B, N = x.shape
    H = params["wq0"].shape[1]
    L = params["wp0"].shape[0]

    tb = min(tile_b, _round_up(B, 8))
    ti = min(tile_items, _round_up(N, 128))
    Bp = _round_up(B, tb)
    Np = _round_up(N, ti)

    x_p = x.astype(jnp.float32)
    if (Bp, Np) != (B, N):
        # Zero rows/cols are exact no-ops for the matmul reduction and for the
        # sum-of-squares feeding the deferred L2 normalization.
        x_p = jnp.pad(x_p, ((0, Bp - B), (0, Np - N)))

    # Streamed (big) weights in bf16 to halve HBM bytes; f32 accumulation.
    wq0 = params["wq0"].astype(stream_dtype)
    wp1 = params["wp1"].astype(stream_dtype)
    bp1 = params["bp1"]
    if Np != N:
        wq0 = jnp.pad(wq0, ((0, Np - N), (0, 0)))
        wp1 = jnp.pad(wp1, ((0, 0), (0, Np - N)))
        bp1 = jnp.pad(bp1, ((0, 0), (0, Np - N)))

    # Split the packed second q-layer into mu / logvar halves so the kernel
    # never slices columns across a lane-tile boundary.
    wq1m, wq1v = params["wq1"][:, :L], params["wq1"][:, L:]
    bq1m, bq1v = params["bq1"][:, :L], params["bq1"][:, L:]
    bq0, wp0, bp0 = params["bq0"], params["wp0"], params["bp0"]

    n_bt, n_it = Bp // tb, Np // ti
    fdt = jnp.dtype(jnp.float32).itemsize
    sdt = jnp.dtype(stream_dtype).itemsize
    vmem_limit = 48 * 1024 * 1024  # explicit; fits v7x's 64 MiB physical VMEM

    enc_cost = pl.CostEstimate(
        flops=2 * Bp * Np * H + 2 * Bp * H * 2 * L + 2 * Bp * L * H,
        transcendentals=2 * Bp * H,
        bytes_accessed=(Bp * Np * fdt + Np * H * sdt + H * 2 * L * fdt
                        + L * H * fdt + (2 * H + 2 * L) * fdt
                        + Bp * 2 * L * fdt + Bp * H * sdt))

    muv, d = pl.pallas_call(
        _encoder_kernel,
        out_shape=(jax.ShapeDtypeStruct((Bp, 2 * L), jnp.float32),
                   jax.ShapeDtypeStruct((Bp, H), stream_dtype)),
        grid_spec=pltpu.PrefetchScalarGridSpec(
            num_scalar_prefetch=0,
            grid=(n_bt, n_it),
            in_specs=[
                pl.BlockSpec((tb, ti), lambda b, k: (b, k)),     # x      (streamed)
                pl.BlockSpec((ti, H), lambda b, k: (k, 0)),      # wq0    (streamed)
                pl.BlockSpec((1, H), lambda b, k: (0, 0)),       # bq0    (resident)
                pl.BlockSpec((H, L), lambda b, k: (0, 0)),       # wq1_mu
                pl.BlockSpec((H, L), lambda b, k: (0, 0)),       # wq1_logvar
                pl.BlockSpec((1, L), lambda b, k: (0, 0)),       # bq1_mu
                pl.BlockSpec((1, L), lambda b, k: (0, 0)),       # bq1_logvar
                pl.BlockSpec((L, H), lambda b, k: (0, 0)),       # wp0
                pl.BlockSpec((1, H), lambda b, k: (0, 0)),       # bp0
            ],
            out_specs=(
                pl.BlockSpec((tb, 2 * L), lambda b, k: (b, 0)),  # mu || logvar
                pl.BlockSpec((tb, H), lambda b, k: (b, 0)),      # decoder hidden
            ),
            scratch_shapes=[pltpu.VMEM((tb, H), jnp.float32),    # x @ wq0 accumulator
                            pltpu.VMEM((tb, 1), jnp.float32)],   # sum(x^2) accumulator
        ),
        compiler_params=pltpu.CompilerParams(
            dimension_semantics=("parallel", "arbitrary"),
            vmem_limit_bytes=vmem_limit),
        cost_estimate=enc_cost,
    )(x_p, wq0, bq0, wq1m, wq1v, bq1m, bq1v, wp0, bp0)

    dec_cost = pl.CostEstimate(
        flops=2 * Bp * H * Np,
        transcendentals=0,
        bytes_accessed=Bp * H * sdt + H * Np * sdt + Np * fdt + Bp * Np * fdt)

    out = pl.pallas_call(
        _decoder_kernel,
        out_shape=jax.ShapeDtypeStruct((Bp, Np), jnp.float32),
        grid_spec=pltpu.PrefetchScalarGridSpec(
            num_scalar_prefetch=0,
            grid=(n_bt, n_it),
            in_specs=[
                pl.BlockSpec((tb, H), lambda b, j: (b, 0)),      # d   (resident per b)
                pl.BlockSpec((H, ti), lambda b, j: (0, j)),      # wp1 (streamed)
                pl.BlockSpec((1, ti), lambda b, j: (0, j)),      # bp1 (streamed)
            ],
            out_specs=pl.BlockSpec((tb, ti), lambda b, j: (b, j)),
        ),
        compiler_params=pltpu.CompilerParams(
            dimension_semantics=("parallel", "parallel"),
            vmem_limit_bytes=vmem_limit),
        cost_estimate=dec_cost,
    )(d, wp1, bp1)

    return out[:B, :N], muv[:B, :L], muv[:B, L:2 * L]


# --------------------------------------------------------------------------
# Params / reference
# --------------------------------------------------------------------------
def init_params(p_dims, key):
    """Deterministic init mimicking MultiVAE.init_weights().
    p_dims = [latent, hidden, n_items]; q_dims = reversed; weights are [in, out]."""
    q_dims = p_dims[::-1]
    temp_q_dims = q_dims[:-1] + [q_dims[-1] * 2]

    def linear(key, d_in, d_out):
        kw, kb = jax.random.split(key)
        std = np.sqrt(2.0 / (d_in + d_out))
        w = std * jax.random.normal(kw, (d_in, d_out), jnp.float32)
        b = 0.001 * jax.random.normal(kb, (1, d_out), jnp.float32)
        return w, b

    keys = jax.random.split(key, 4)
    wq0, bq0 = linear(keys[0], temp_q_dims[0], temp_q_dims[1])   # n_items -> hidden
    wq1, bq1 = linear(keys[1], temp_q_dims[1], temp_q_dims[2])   # hidden  -> 2*latent
    wp0, bp0 = linear(keys[2], p_dims[0], p_dims[1])             # latent  -> hidden
    wp1, bp1 = linear(keys[3], p_dims[1], p_dims[2])             # hidden  -> n_items
    return dict(wq0=wq0, bq0=bq0, wq1=wq1, bq1=bq1,
                wp0=wp0, bp0=bp0, wp1=wp1, bp1=bp1)


def reference_forward(x, p):
    """Plain-JAX f32 reference (eval-mode semantics)."""
    norm = jnp.sqrt(jnp.sum(x * x, axis=1, keepdims=True))
    h = x / jnp.maximum(norm, 1e-12)
    h = jnp.tanh(h @ p["wq0"] + p["bq0"])
    h2 = h @ p["wq1"] + p["bq1"]
    L = p["wp0"].shape[0]
    mu, logvar = h2[:, :L], h2[:, L:]
    d = jnp.tanh(mu @ p["wp0"] + p["bp0"])
    out = d @ p["wp1"] + p["bp1"]
    return out, mu, logvar


if __name__ == "__main__":
    # Small shapes that still exercise the tiling: latent=64, hidden=128,
    # n_items=1024, batch=16 with tile_b=8, tile_items=256 -> grid (2, 4).
    p_dims = [64, 128, 1024]
    B = 16

    key = jax.random.PRNGKey(0)
    kx, kp = jax.random.split(key)
    x = jnp.abs(jax.random.normal(kx, (B, p_dims[-1]), jnp.float32))
    params = init_params(p_dims, kp)

    fwd = jax.jit(lambda xx, pp: multivae_forward(xx, pp, tile_b=8, tile_items=256))
    out, mu, logvar = fwd(x, params)
    jax.block_until_ready((out, mu, logvar))

    # Sanity check vs plain-JAX f32 reference (looser tolerance: streamed
    # weights are bf16, accumulation is f32).
    ro, rm, rv = reference_forward(x, params)
    assert out.shape == ro.shape and mu.shape == rm.shape and logvar.shape == rv.shape
    assert jnp.allclose(out, ro, atol=2e-2, rtol=2e-2), float(jnp.max(jnp.abs(out - ro)))
    assert jnp.allclose(mu, rm, atol=2e-2, rtol=2e-2), float(jnp.max(jnp.abs(mu - rm)))
    assert jnp.allclose(logvar, rv, atol=2e-2, rtol=2e-2), float(jnp.max(jnp.abs(logvar - rv)))

    print("KERNEL_OK")
</pallas_src>

<mosaic_0001>
module attributes {stable_mosaic.version = 11 : i64} {
  func.func @_encoder_kernel(%arg0: i32, %arg1: i32, %arg2: memref<8x256xf32, #tpu.memory_space<vmem>>, %arg3: memref<256x128xbf16, #tpu.memory_space<vmem>>, %arg4: memref<1x128xf32, #tpu.memory_space<vmem>>, %arg5: memref<128x64xf32, #tpu.memory_space<vmem>>, %arg6: memref<128x64xf32, #tpu.memory_space<vmem>>, %arg7: memref<1x64xf32, #tpu.memory_space<vmem>>, %arg8: memref<1x64xf32, #tpu.memory_space<vmem>>, %arg9: memref<64x128xf32, #tpu.memory_space<vmem>>, %arg10: memref<1x128xf32, #tpu.memory_space<vmem>>, %arg11: memref<8x128xf32, #tpu.memory_space<vmem>>, %arg12: memref<8x128xbf16, #tpu.memory_space<vmem>>, %arg13: memref<8x128xf32, #tpu.memory_space<vmem>>, %arg14: memref<8x1xf32, #tpu.memory_space<vmem>>) attributes {dimension_semantics = [#tpu.dimension_semantics<parallel>, #tpu.dimension_semantics<arbitrary>], iteration_bounds = array<i64: 2, 4>, scalar_prefetch = 0 : i64, scratch_operands = 2 : i64, tpu.core_type = #tpu.core_type<tc>, window_params = [{transform_indices = @transform_0, window_bounds = array<i64: 8, 256>}, {transform_indices = @transform_1, window_bounds = array<i64: 256, 128>}, {pipeline_mode = #tpu.pipeline_mode<synchronous>, transform_indices = @transform_2, window_bounds = array<i64: 1, 128>}, {pipeline_mode = #tpu.pipeline_mode<synchronous>, transform_indices = @transform_3, window_bounds = array<i64: 128, 64>}, {pipeline_mode = #tpu.pipeline_mode<synchronous>, transform_indices = @transform_4, window_bounds = array<i64: 128, 64>}, {pipeline_mode = #tpu.pipeline_mode<synchronous>, transform_indices = @transform_5, window_bounds = array<i64: 1, 64>}, {pipeline_mode = #tpu.pipeline_mode<synchronous>, transform_indices = @transform_6, window_bounds = array<i64: 1, 64>}, {pipeline_mode = #tpu.pipeline_mode<synchronous>, transform_indices = @transform_7, window_bounds = array<i64: 64, 128>}, {pipeline_mode = #tpu.pipeline_mode<synchronous>, transform_indices = @transform_8, window_bounds = array<i64: 1, 128>}, {transform_indices = @transform_9, window_bounds = array<i64: 8, 128>}, {transform_indices = @transform_10, window_bounds = array<i64: 8, 128>}]} {
    %c0_i32 = arith.constant 0 : i32
    %0 = arith.cmpi eq, %arg1, %c0_i32 : i32
    %1 = arith.extui %0 : i1 to i32
    %c0_i32_0 = arith.constant 0 : i32
    %2 = arith.cmpi ne, %1, %c0_i32_0 : i32
    scf.if %2 {
      %cst_14 = arith.constant 0.000000e+00 : f32
      %19 = vector.broadcast %cst_14 : f32 to vector<8x128xf32>
      %c0_15 = arith.constant 0 : index
      %c0_16 = arith.constant 0 : index
      %20 = vector.load %arg13[%c0_15, %c0_16] : memref<8x128xf32, #tpu.memory_space<vmem>>, vector<8x128xf32>
      tpu.vector_store %arg13[%c0_15, %c0_16], %19 {strides = array<i32>} : memref<8x128xf32, #tpu.memory_space<vmem>>, vector<8x128xf32>,
      %cst_17 = arith.constant 0.000000e+00 : f32
      %21 = vector.broadcast %cst_17 : f32 to vector<8x1xf32>
      %c0_18 = arith.constant 0 : index
      %c0_19 = arith.constant 0 : index
      %22 = vector.load %arg14[%c0_18, %c0_19] : memref<8x1xf32, #tpu.memory_space<vmem>>, vector<8x1xf32>
      tpu.vector_store %arg14[%c0_18, %c0_19], %21 {strides = array<i32>} : memref<8x1xf32, #tpu.memory_space<vmem>>, vector<8x1xf32>,
    } else {
    }
    %c0 = arith.constant 0 : index
    %c0_1 = arith.constant 0 : index
    %3 = vector.load %arg2[%c0, %c0_1] : memref<8x256xf32, #tpu.memory_space<vmem>>, vector<8x256xf32>
    %c0_2 = arith.constant 0 : index
    %c0_3 = arith.constant 0 : index
    %4 = vector.load %arg13[%c0_2, %c0_3] : memref<8x128xf32, #tpu.memory_space<vmem>>, vector<8x128xf32>
    %5 = arith.truncf %3 : vector<8x256xf32> to vector<8x256xbf16>
    %c0_4 = arith.constant 0 : index
    %c0_5 = arith.constant 0 : index
    %6 = vector.load %arg3[%c0_4, %c0_5] : memref<256x128xbf16, #tpu.memory_space<vmem>>, vector<256x128xbf16>
    %cst = arith.constant dense<0.000000e+00> : vector<8x128xf32>
    %7 = tpu.matmul %5, %6, %cst {dimension_numbers = #tpu.dot_dimension_numbers<[1], [0], [0], [1], [0, 0, 1, 1], [], []>} : vector<8x256xbf16>, vector<256x128xbf16>, vector<8x128xf32> -> vector<8x128xf32>
    %8 = arith.addf %4, %7 : vector<8x128xf32>
    %c0_6 = arith.constant 0 : index
    %c0_7 = arith.constant 0 : index
    %9 = vector.load %arg13[%c0_6, %c0_7] : memref<8x128xf32, #tpu.memory_space<vmem>>, vector<8x128xf32>
    tpu.vector_store %arg13[%c0_6, %c0_7], %8 {strides = array<i32>} : memref<8x128xf32, #tpu.memory_space<vmem>>, vector<8x128xf32>,
    %c0_8 = arith.constant 0 : index
    %c0_9 = arith.constant 0 : index
    %10 = vector.load %arg14[%c0_8, %c0_9] : memref<8x1xf32, #tpu.memory_space<vmem>>, vector<8x1xf32>
    %11 = arith.mulf %3, %3 : vector<8x256xf32>
    %cst_10 = arith.constant dense<0.000000e+00> : vector<8xf32>
    %12 = vector.multi_reduction <add>, %11, %cst_10 [1] : vector<8x256xf32> to vector<8xf32>
    %13 = vector.shape_cast %12 : vector<8xf32> to vector<8x1xf32>
    %14 = arith.addf %10, %13 : vector<8x1xf32>
    %c0_11 = arith.constant 0 : index
    %c0_12 = arith.constant 0 : index
    %15 = vector.load %arg14[%c0_11, %c0_12] : memref<8x1xf32, #tpu.memory_space<vmem>>, vector<8x1xf32>
    tpu.vector_store %arg14[%c0_11, %c0_12], %14 {strides = array<i32>} : memref<8x1xf32, #tpu.memory_space<vmem>>, vector<8x1xf32>,
    %c3_i32 = arith.constant 3 : i32
    %16 = arith.cmpi eq, %arg1, %c3_i32 : i32
    %17 = arith.extui %16 : i1 to i32
    %c0_i32_13 = arith.constant 0 : i32
    %18 = arith.cmpi ne, %17, %c0_i32_13 : i32
    scf.if %18 {
      %c0_14 = arith.constant 0 : index
      %c0_15 = arith.constant 0 : index
      %19 = vector.load %arg14[%c0_14, %c0_15] : memref<8x1xf32, #tpu.memory_space<vmem>>, vector<8x1xf32>
      %cst_16 = arith.constant 1.000000e-24 : f32
      %20 = vector.broadcast %cst_16 : f32 to vector<8x1xf32>
      %21 = arith.maximumf %19, %20 : vector<8x1xf32>
      %22 = math.rsqrt %21 : vector<8x1xf32>
      %c0_17 = arith.constant 0 : index
      %c0_18 = arith.constant 0 : index
      %23 = vector.load %arg13[%c0_17, %c0_18] : memref<8x128xf32, #tpu.memory_space<vmem>>, vector<8x128xf32>
      %24 = vector.broadcast %22 : vector<8x1xf32> to vector<8x128xf32>
      %25 = arith.mulf %23, %24 : vector<8x128xf32>
      %c0_19 = arith.constant 0 : index
      %c0_20 = arith.constant 0 : index
      %26 = vector.load %arg4[%c0_19, %c0_20] : memref<1x128xf32, #tpu.memory_space<vmem>>, vector<1x128xf32>
      %27 = vector.broadcast %26 : vector<1x128xf32> to vector<8x128xf32>
      %28 = arith.addf %25, %27 : vector<8x128xf32>
      %29 = math.tanh %28 : vector<8x128xf32>
      %c0_21 = arith.constant 0 : index
      %c0_22 = arith.constant 0 : index
      %30 = vector.load %arg5[%c0_21, %c0_22] : memref<128x64xf32, #tpu.memory_space<vmem>>, vector<128x64xf32>
      %cst_23 = arith.constant dense<0.000000e+00> : vector<8x64xf32>
      %31 = tpu.matmul %29, %30, %cst_23 {dimension_numbers = #tpu.dot_dimension_numbers<[1], [0], [0], [1], [0, 0, 1, 1], [], []>} : vector<8x128xf32>, vector<128x64xf32>, vector<8x64xf32> -> vector<8x64xf32>
      %c0_24 = arith.constant 0 : index
      %c0_25 = arith.constant 0 : index
      %32 = vector.load %arg7[%c0_24, %c0_25] : memref<1x64xf32, #tpu.memory_space<vmem>>, vector<1x64xf32>
      %33 = vector.broadcast %32 : vector<1x64xf32> to vector<8x64xf32>
      %34 = arith.addf %31, %33 : vector<8x64xf32>
      %c0_26 = arith.constant 0 : index
      %c0_27 = arith.constant 0 : index
      %35 = vector.load %arg6[%c0_26, %c0_27] : memref<128x64xf32, #tpu.memory_space<vmem>>, vector<128x64xf32>
      %cst_28 = arith.constant dense<0.000000e+00> : vector<8x64xf32>
      %36 = tpu.matmul %29, %35, %cst_28 {dimension_numbers = #tpu.dot_dimension_numbers<[1], [0], [0], [1], [0, 0, 1, 1], [], []>} : vector<8x128xf32>, vector<128x64xf32>, vector<8x64xf32> -> vector<8x64xf32>
      %c0_29 = arith.constant 0 : index
      %c0_30 = arith.constant 0 : index
      %37 = vector.load %arg8[%c0_29, %c0_30] : memref<1x64xf32, #tpu.memory_space<vmem>>, vector<1x64xf32>
      %38 = vector.broadcast %37 : vector<1x64xf32> to vector<8x64xf32>
      %39 = arith.addf %36, %38 : vector<8x64xf32>
      %40 = tpu.concatenate %34, %39 in 1 : vector<8x64xf32>, vector<8x64xf32> -> vector<8x128xf32>
      %c0_31 = arith.constant 0 : index
      %c0_32 = arith.constant 0 : index
      %41 = vector.load %arg11[%c0_31, %c0_32] : memref<8x128xf32, #tpu.memory_space<vmem>>, vector<8x128xf32>
      tpu.vector_store %arg11[%c0_31, %c0_32], %40 {strides = array<i32>} : memref<8x128xf32, #tpu.memory_space<vmem>>, vector<8x128xf32>,
      %c0_33 = arith.constant 0 : index
      %c0_34 = arith.constant 0 : index
      %42 = vector.load %arg9[%c0_33, %c0_34] : memref<64x128xf32, #tpu.memory_space<vmem>>, vector<64x128xf32>
      %cst_35 = arith.constant dense<0.000000e+00> : vector<8x128xf32>
      %43 = tpu.matmul %34, %42, %cst_35 {dimension_numbers = #tpu.dot_dimension_numbers<[1], [0], [0], [1], [0, 0, 1, 1], [], []>} : vector<8x64xf32>, vector<64x128xf32>, vector<8x128xf32> -> vector<8x128xf32>
      %c0_36 = arith.constant 0 : index
      %c0_37 = arith.constant 0 : index
      %44 = vector.load %arg10[%c0_36, %c0_37] : memref<1x128xf32, #tpu.memory_space<vmem>>, vector<1x128xf32>
      %45 = vector.broadcast %44 : vector<1x128xf32> to vector<8x128xf32>
      %46 = arith.addf %43, %45 : vector<8x128xf32>
      %47 = math.tanh %46 : vector<8x128xf32>
      %48 = arith.truncf %47 : vector<8x128xf32> to vector<8x128xbf16>
      %c0_38 = arith.constant 0 : index
      %c0_39 = arith.constant 0 : index
      %49 = vector.load %arg12[%c0_38, %c0_39] : memref<8x128xbf16, #tpu.memory_space<vmem>>, vector<8x128xbf16>
      tpu.vector_store %arg12[%c0_38, %c0_39], %48 {strides = array<i32>} : memref<8x128xbf16, #tpu.memory_space<vmem>>, vector<8x128xbf16>,
    } else {
    }
    return
  }
  func.func @transform_0(%arg0: i32, %arg1: i32) -> (i32, i32) {
    %c0_i32 = arith.constant 0 : i32
    return %arg0, %arg1 : i32, i32
  }
  func.func @transform_1(%arg0: i32, %arg1: i32) -> (i32, i32) {
    %c0_i32 = arith.constant 0 : i32
    %c0_i32_0 = arith.constant 0 : i32
    return %arg1, %c0_i32 : i32, i32
  }
  func.func @transform_2(%arg0: i32, %arg1: i32) -> (i32, i32) {
    %c0_i32 = arith.constant 0 : i32
    %c0_i32_0 = arith.constant 0 : i32
    %c0_i32_1 = arith.constant 0 : i32
    return %c0_i32, %c0_i32_0 : i32, i32
  }
  func.func @transform_3(%arg0: i32, %arg1: i32) -> (i32, i32) {
    %c0_i32 = arith.constant 0 : i32
    %c0_i32_0 = arith.constant 0 : i32
    %c0_i32_1 = arith.constant 0 : i32
    return %c0_i32, %c0_i32_0 : i32, i32
  }
  func.func @transform_4(%arg0: i32, %arg1: i32) -> (i32, i32) {
    %c0_i32 = arith.constant 0 : i32
    %c0_i32_0 = arith.constant 0 : i32
    %c0_i32_1 = arith.constant 0 : i32
    return %c0_i32, %c0_i32_0 : i32, i32
  }
  func.func @transform_5(%arg0: i32, %arg1: i32) -> (i32, i32) {
    %c0_i32 = arith.constant 0 : i32
    %c0_i32_0 = arith.constant 0 : i32
    %c0_i32_1 = arith.constant 0 : i32
    return %c0_i32, %c0_i32_0 : i32, i32
  }
  func.func @transform_6(%arg0: i32, %arg1: i32) -> (i32, i32) {
    %c0_i32 = arith.constant 0 : i32
    %c0_i32_0 = arith.constant 0 : i32
    %c0_i32_1 = arith.constant 0 : i32
    return %c0_i32, %c0_i32_0 : i32, i32
  }
  func.func @transform_7(%arg0: i32, %arg1: i32) -> (i32, i32) {
    %c0_i32 = arith.constant 0 : i32
    %c0_i32_0 = arith.constant 0 : i32
    %c0_i32_1 = arith.constant 0 : i32
    return %c0_i32, %c0_i32_0 : i32, i32
  }
  func.func @transform_8(%arg0: i32, %arg1: i32) -> (i32, i32) {
    %c0_i32 = arith.constant 0 : i32
    %c0_i32_0 = arith.constant 0 : i32
    %c0_i32_1 = arith.constant 0 : i32
    return %c0_i32, %c0_i32_0 : i32, i32
  }
  func.func @transform_9(%arg0: i32, %arg1: i32) -> (i32, i32) {
    %c0_i32 = arith.constant 0 : i32
    %c0_i32_0 = arith.constant 0 : i32
    return %arg0, %c0_i32 : i32, i32
  }
  func.func @transform_10(%arg0: i32, %arg1: i32) -> (i32, i32) {
    %c0_i32 = arith.constant 0 : i32
    %c0_i32_0 = arith.constant 0 : i32
    return %arg0, %c0_i32 : i32, i32
  }
}

module attributes {stable_mosaic.version = 11 : i64} {
  func.func @_decoder_kernel(%arg0: i32, %arg1: i32, %arg2: memref<8x128xbf16, #tpu.memory_space<vmem>>, %arg3: memref<128x256xbf16, #tpu.memory_space<vmem>>, %arg4: memref<1x256xf32, #tpu.memory_space<vmem>>, %arg5: memref<8x256xf32, #tpu.memory_space<vmem>>) attributes {dimension_semantics = [#tpu.dimension_semantics<parallel>, #tpu.dimension_semantics<parallel>], iteration_bounds = array<i64: 2, 4>, scalar_prefetch = 0 : i64, scratch_operands = 0 : i64, tpu.core_type = #tpu.core_type<tc>, window_params = [{transform_indices = @transform_0, window_bounds = array<i64: 8, 128>}, {transform_indices = @transform_1, window_bounds = array<i64: 128, 256>}, {transform_indices = @transform_2, window_bounds = array<i64: 1, 256>}, {transform_indices = @transform_3, window_bounds = array<i64: 8, 256>}]} {
    %c0 = arith.constant 0 : index
    %c0_0 = arith.constant 0 : index
    %0 = vector.load %arg2[%c0, %c0_0] : memref<8x128xbf16, #tpu.memory_space<vmem>>, vector<8x128xbf16>
    %c0_1 = arith.constant 0 : index
    %c0_2 = arith.constant 0 : index
    %1 = vector.load %arg3[%c0_1, %c0_2] : memref<128x256xbf16, #tpu.memory_space<vmem>>, vector<128x256xbf16>
    %cst = arith.constant dense<0.000000e+00> : vector<8x256xf32>
    %2 = tpu.matmul %0, %1, %cst {dimension_numbers = #tpu.dot_dimension_numbers<[1], [0], [0], [1], [0, 0, 1, 1], [], []>} : vector<8x128xbf16>, vector<128x256xbf16>, vector<8x256xf32> -> vector<8x256xf32>
    %c0_3 = arith.constant 0 : index
    %c0_4 = arith.constant 0 : index
    %3 = vector.load %arg4[%c0_3, %c0_4] : memref<1x256xf32, #tpu.memory_space<vmem>>, vector<1x256xf32>
    %4 = vector.broadcast %3 : vector<1x256xf32> to vector<8x256xf32>
    %5 = arith.addf %2, %4 : vector<8x256xf32>
    %c0_5 = arith.constant 0 : index
    %c0_6 = arith.constant 0 : index
    %6 = vector.load %arg5[%c0_5, %c0_6] : memref<8x256xf32, #tpu.memory_space<vmem>>, vector<8x256xf32>
    tpu.vector_store %arg5[%c0_5, %c0_6], %5 {strides = array<i32>} : memref<8x256xf32, #tpu.memory_space<vmem>>, vector<8x256xf32>,
    return
  }
  func.func @transform_0(%arg0: i32, %arg1: i32) -> (i32, i32) {
    %c0_i32 = arith.constant 0 : i32
    %c0_i32_0 = arith.constant 0 : i32
    return %arg0, %c0_i32 : i32, i32
  }
  func.func @transform_1(%arg0: i32, %arg1: i32) -> (i32, i32) {
    %c0_i32 = arith.constant 0 : i32
    %c0_i32_0 = arith.constant 0 : i32
    return %c0_i32, %arg1 : i32, i32
  }
  func.func @transform_2(%arg0: i32, %arg1: i32) -> (i32, i32) {
    %c0_i32 = arith.constant 0 : i32
    %c0_i32_0 = arith.constant 0 : i32
    return %c0_i32, %arg1 : i32, i32
  }
  func.func @transform_3(%arg0: i32, %arg1: i32) -> (i32, i32) {
    %c0_i32 = arith.constant 0 : i32
    return %arg0, %arg1 : i32, i32
  }
}

</mosaic_0001>

<llo_original>
// kernel: _lambda_.2
$region0: #{_lambda_.2}
  #allocation0 [shape = 'u32[]', space=smem, size = 0x4, offset = 0x4, fixed_abs, tag = 'smem constant byte address 0x4 - core index']
  #allocation1 [shape = 'u32[72,128]{1,0:T(1,128)}', space=vmem, size = 0x9000, scoped, tag = 'internal scratch']
  #allocation2 [shape = 'f32[8,128]{1,0:T(8,128)}', space=vmem, size = 0x1000, scoped, tag = 'scratch operand']
  #allocation3 [shape = 'f32[8,1]{1,0:T(8,128)}', space=vmem, size = 0x1000, scoped, tag = 'scratch operand']
  %s0 = inlined_call_operand.vmem [shape: f32[16,1024], index: 0, kind: input, shape index: {}]
  %s1 = inlined_call_operand.vmem [shape: bf16[1024,128], index: 1, kind: input, shape index: {}]
  %s2 = inlined_call_operand.vmem [shape: f32[1,128], index: 2, kind: input, shape index: {}]
  %s3 = inlined_call_operand.vmem [shape: f32[128,64], index: 3, kind: input, shape index: {}]
  %s4 = inlined_call_operand.vmem [shape: f32[128,64], index: 4, kind: input, shape index: {}]
  %s5 = inlined_call_operand.vmem [shape: f32[1,64], index: 5, kind: input, shape index: {}]
  %s6 = inlined_call_operand.vmem [shape: f32[1,64], index: 6, kind: input, shape index: {}]
  %s7 = inlined_call_operand.vmem [shape: f32[64,128], index: 7, kind: input, shape index: {}]
  %s8 = inlined_call_operand.vmem [shape: f32[1,128], index: 8, kind: input, shape index: {}]
  %s9 = inlined_call_operand.vmem [shape: f32[16,128], index: 9, kind: output, shape index: {0}]
  %s10 = inlined_call_operand.vmem [shape: bf16[16,128], index: 10, kind: output, shape index: {1}]
  %11 = xla_tuple %s9, %s10
  %s12 = sld [smem:[#allocation0]]
  $region85: #{_lambda_.2} parent=0
    _
  %s14 = ssub.s32 1, %s12
  %s15 = scalar_select 0, %s14, %s12
  loop: start=0, step=1, limit=10
  $region2: #{_lambda_.2} parent=0 // loop_pre_header
    _
  $region3: #{_lambda_.2} parent=0 // loop_header
    %s17 = sphi 0, %s21
    %p18 = scmp.ge.s32.totalorder %s17, 10
    %s24 = sphi 0, %s36
    %s25 = sphi 0, %s32
    %s26 = sphi 0, %s24
    %s27 = sphi 0, %s25
    %s28 = sphi 0, %s26
    %s29 = sphi 0, %s27
    %s41 = sphi 0, %s43
    %s44 = sphi 0, %s41
    %s45 = sphi 0, %s44
    %s61 = sphi 0, %s45
    %s67 = sphi 0, %s69
    %s70 = sphi 0, %s67
    %s71 = sphi 0, %s70
    %s87 = sphi 0, %s71
    %s91 = sphi 0, %s91
    %s93 = sphi 0, %s91
    %s94 = sphi 0, %s93
    %s108 = sphi 0, %s94
    %s112 = sphi 0, %s112
    %s114 = sphi 0, %s112
    %s115 = sphi 0, %s114
    %s129 = sphi 0, %s115
    %s133 = sphi 0, %s133
    %s135 = sphi 0, %s133
    %s136 = sphi 0, %s135
    %s150 = sphi 0, %s136
    %s154 = sphi 0, %s154
    %s156 = sphi 0, %s154
    %s157 = sphi 0, %s156
    %s171 = sphi 0, %s157
    %s175 = sphi 0, %s175
    %s177 = sphi 0, %s175
    %s178 = sphi 0, %s177
    %s192 = sphi 0, %s178
    %s196 = sphi 0, %s196
    %s198 = sphi 0, %s196
    %s199 = sphi 0, %s198
    %s213 = sphi 0, %s199
    %s217 = sphi 0, %s217
    %s219 = sphi 0, %s217
    %s220 = sphi 0, %s219
    %s234 = sphi 0, %s220
    %s240 = sphi 0, %s242
    %s243 = sphi 0, %s240
    %s244 = sphi 0, %s243
    %s260 = sphi 0, %s244
    %s266 = sphi 0, %s268
    %s269 = sphi 0, %s266
    %s270 = sphi 0, %s269
    %s286 = sphi 0, %s270
  $region4: #{_lambda_.2} parent=0 // loop_header_branch
    %20 = sbr.rel (%p18) target = $region8
  $region5: #{_lambda_.2} parent=0 // loop_body
    %s22 = ssub.s32 %s17, 1
    %s23 = ssub.s32 %s17, 2
    %s30 = sadd.s32 1, %s25
    %p31 = scmp.ge.s32.totalorder %s30, 4
    %s32 = scalar_select %p31, 0, %s30
    %s33 = sadd.s32 1, %s24
    %s34 = scalar_select %p31, %s33, %s24
    %p35 = scmp.ge.s32.totalorder %s34, 2
    %s36 = scalar_select %p35, 0, %s34
    %s37 = ssub.s32 %s24, %s36
    %s38 = ssub.s32 %s25, %s32
    %s39 = sor.u32 %s37, %s38
    %p40 = scmp.eq.s32.totalorder %s39, 0
    %s42 = sadd.s32 %s41, 1
    %s43 = scalar_select %p40, %s41, %s42
    %p46 = pneg %p40
    %p47 = scmp.eq.s32.totalorder %s17, 7
    %p48 = por %p46, %p47
    %p49 = scmp.ne.s32.totalorder %s41, %s44
    %p50 = scmp.eq.s32.totalorder %s17, 0
    %p51 = por %p49, %p50
    %p52 = scmp.ne.s32.totalorder %s41, %s44
    %p53 = scmp.eq.s32.totalorder %s22, 7
    %p54 = por %p52, %p53
    %p55 = scmp.ne.s32.totalorder %s44, %s45
    %p56 = scmp.eq.s32.totalorder %s22, 0
    %p57 = por %p55, %p56
    %p58 = scmp.ne.s32.totalorder %s44, %s45
    %p59 = scmp.eq.s32.totalorder %s23, 7
    %p60 = por %p58, %p59
    %p62 = scmp.ne.s32.totalorder %s45, %s61
    %p63 = scmp.eq.s32.totalorder %s23, 0
    %p64 = por %p62, %p63
    %s65 = ssub.s32 %s25, %s32
    %p66 = scmp.eq.s32.totalorder %s65, 0
    %s68 = sadd.s32 %s67, 1
    %s69 = scalar_select %p66, %s67, %s68
    %p72 = pneg %p66
    %p73 = scmp.eq.s32.totalorder %s17, 7
    %p74 = por %p72, %p73
    %p75 = scmp.ne.s32.totalorder %s67, %s70
    %p76 = scmp.eq.s32.totalorder %s17, 0
    %p77 = por %p75, %p76
    %p78 = scmp.ne.s32.totalorder %s67, %s70
    %p79 = scmp.eq.s32.totalorder %s22, 7
    %p80 = por %p78, %p79
    %p81 = scmp.ne.s32.totalorder %s70, %s71
    %p82 = scmp.eq.s32.totalorder %s22, 0
    %p83 = por %p81, %p82
    %p84 = scmp.ne.s32.totalorder %s70, %s71
    %p85 = scmp.eq.s32.totalorder %s23, 7
    %p86 = por %p84, %p85
    %p88 = scmp.ne.s32.totalorder %s71, %s87
    %p89 = scmp.eq.s32.totalorder %s23, 0
    %p90 = por %p88, %p89
    %s92 = sadd.s32 %s91, 1
    %p95 = scmp.eq.s32.totalorder %s17, 7
    %p96 = scmp.ne.s32.totalorder %s91, %s93
    %p97 = scmp.eq.s32.totalorder %s17, 0
    %p98 = por %p96, %p97
    %p99 = scmp.ne.s32.totalorder %s91, %s93
    %p100 = scmp.eq.s32.totalorder %s22, 7
    %p101 = por %p99, %p100
    %p102 = scmp.ne.s32.totalorder %s93, %s94
    %p103 = scmp.eq.s32.totalorder %s22, 0
    %p104 = por %p102, %p103
    %p105 = scmp.ne.s32.totalorder %s93, %s94
    %p106 = scmp.eq.s32.totalorder %s23, 7
    %p107 = por %p105, %p106
    %p109 = scmp.ne.s32.totalorder %s94, %s108
    %p110 = scmp.eq.s32.totalorder %s23, 0
    %p111 = por %p109, %p110
    %s113 = sadd.s32 %s112, 1
    %p116 = scmp.eq.s32.totalorder %s17, 7
    %p117 = scmp.ne.s32.totalorder %s112, %s114
    %p118 = scmp.eq.s32.totalorder %s17, 0
    %p119 = por %p117, %p118
    %p120 = scmp.ne.s32.totalorder %s112, %s114
    %p121 = scmp.eq.s32.totalorder %s22, 7
    %p122 = por %p120, %p121
    %p123 = scmp.ne.s32.totalorder %s114, %s115
    %p124 = scmp.eq.s32.totalorder %s22, 0
    %p125 = por %p123, %p124
    %p126 = scmp.ne.s32.totalorder %s114, %s115
    %p127 = scmp.eq.s32.totalorder %s23, 7
    %p128 = por %p126, %p127
    %p130 = scmp.ne.s32.totalorder %s115, %s129
    %p131 = scmp.eq.s32.totalorder %s23, 0
    %p132 = por %p130, %p131
    %s134 = sadd.s32 %s133, 1
    %p137 = scmp.eq.s32.totalorder %s17, 7
    %p138 = scmp.ne.s32.totalorder %s133, %s135
    %p139 = scmp.eq.s32.totalorder %s17, 0
    %p140 = por %p138, %p139
    %p141 = scmp.ne.s32.totalorder %s133, %s135
    %p142 = scmp.eq.s32.totalorder %s22, 7
    %p143 = por %p141, %p142
    %p144 = scmp.ne.s32.totalorder %s135, %s136
    %p145 = scmp.eq.s32.totalorder %s22, 0
    %p146 = por %p144, %p145
    %p147 = scmp.ne.s32.totalorder %s135, %s136
    %p148 = scmp.eq.s32.totalorder %s23, 7
    %p149 = por %p147, %p148
    %p151 = scmp.ne.s32.totalorder %s136, %s150
    %p152 = scmp.eq.s32.totalorder %s23, 0
    %p153 = por %p151, %p152
    %s155 = sadd.s32 %s154, 1
    %p158 = scmp.eq.s32.totalorder %s17, 7
    %p159 = scmp.ne.s32.totalorder %s154, %s156
    %p160 = scmp.eq.s32.totalorder %s17, 0
    %p161 = por %p159, %p160
    %p162 = scmp.ne.s32.totalorder %s154, %s156
    %p163 = scmp.eq.s32.totalorder %s22, 7
    %p164 = por %p162, %p163
    %p165 = scmp.ne.s32.totalorder %s156, %s157
    %p166 = scmp.eq.s32.totalorder %s22, 0
    %p167 = por %p165, %p166
    %p168 = scmp.ne.s32.totalorder %s156, %s157
    %p169 = scmp.eq.s32.totalorder %s23, 7
    %p170 = por %p168, %p169
    %p172 = scmp.ne.s32.totalorder %s157, %s171
    %p173 = scmp.eq.s32.totalorder %s23, 0
    %p174 = por %p172, %p173
    %s176 = sadd.s32 %s175, 1
    %p179 = scmp.eq.s32.totalorder %s17, 7
    %p180 = scmp.ne.s32.totalorder %s175, %s177
    %p181 = scmp.eq.s32.totalorder %s17, 0
    %p182 = por %p180, %p181
    %p183 = scmp.ne.s32.totalorder %s175, %s177
    %p184 = scmp.eq.s32.totalorder %s22, 7
    %p185 = por %p183, %p184
    %p186 = scmp.ne.s32.totalorder %s177, %s178
    %p187 = scmp.eq.s32.totalorder %s22, 0
    %p188 = por %p186, %p187
    %p189 = scmp.ne.s32.totalorder %s177, %s178
    %p190 = scmp.eq.s32.totalorder %s23, 7
    %p191 = por %p189, %p190
    %p193 = scmp.ne.s32.totalorder %s178, %s192
    %p194 = scmp.eq.s32.totalorder %s23, 0
    %p195 = por %p193, %p194
    %s197 = sadd.s32 %s196, 1
    %p200 = scmp.eq.s32.totalorder %s17, 7
    %p201 = scmp.ne.s32.totalorder %s196, %s198
    %p202 = scmp.eq.s32.totalorder %s17, 0
    %p203 = por %p201, %p202
    %p204 = scmp.ne.s32.totalorder %s196, %s198
    %p205 = scmp.eq.s32.totalorder %s22, 7
    %p206 = por %p204, %p205
    %p207 = scmp.ne.s32.totalorder %s198, %s199
    %p208 = scmp.eq.s32.totalorder %s22, 0
    %p209 = por %p207, %p208
    %p210 = scmp.ne.s32.totalorder %s198, %s199
    %p211 = scmp.eq.s32.totalorder %s23, 7
    %p212 = por %p210, %p211
    %p214 = scmp.ne.s32.totalorder %s199, %s213
    %p215 = scmp.eq.s32.totalorder %s23, 0
    %p216 = por %p214, %p215
    %s218 = sadd.s32 %s217, 1
    %p221 = scmp.eq.s32.totalorder %s17, 7
    %p222 = scmp.ne.s32.totalorder %s217, %s219
    %p223 = scmp.eq.s32.totalorder %s17, 0
    %p224 = por %p222, %p223
    %p225 = scmp.ne.s32.totalorder %s217, %s219
    %p226 = scmp.eq.s32.totalorder %s22, 7
    %p227 = por %p225, %p226
    %p228 = scmp.ne.s32.totalorder %s219, %s220
    %p229 = scmp.eq.s32.totalorder %s22, 0
    %p230 = por %p228, %p229
    %p231 = scmp.ne.s32.totalorder %s219, %s220
    %p232 = scmp.eq.s32.totalorder %s23, 7
    %p233 = por %p231, %p232
    %p235 = scmp.ne.s32.totalorder %s220, %s234
    %p236 = scmp.eq.s32.totalorder %s23, 0
    %p237 = por %p235, %p236
    %s238 = ssub.s32 %s24, %s36
    %p239 = scmp.eq.s32.totalorder %s238, 0
    %s241 = sadd.s32 %s240, 1
    %s242 = scalar_select %p239, %s240, %s241
    %p245 = pneg %p239
    %p246 = scmp.eq.s32.totalorder %s17, 7
    %p247 = por %p245, %p246
    %p248 = scmp.ne.s32.totalorder %s240, %s243
    %p249 = scmp.eq.s32.totalorder %s17, 0
    %p250 = por %p248, %p249
    %p251 = scmp.ne.s32.totalorder %s240, %s243
    %p252 = scmp.eq.s32.totalorder %s22, 7
    %p253 = por %p251, %p252
    %p254 = scmp.ne.s32.totalorder %s243, %s244
    %p255 = scmp.eq.s32.totalorder %s22, 0
    %p256 = por %p254, %p255
    %p257 = scmp.ne.s32.totalorder %s243, %s244
    %p258 = scmp.eq.s32.totalorder %s23, 7
    %p259 = por %p257, %p258
    %p261 = scmp.ne.s32.totalorder %s244, %s260
    %p262 = scmp.eq.s32.totalorder %s23, 0
    %p263 = por %p261, %p262
    %s264 = ssub.s32 %s24, %s36
    %p265 = scmp.eq.s32.totalorder %s264, 0
    %s267 = sadd.s32 %s266, 1
    %s268 = scalar_select %p265, %s266, %s267
    %p271 = pneg %p265
    %p272 = scmp.eq.s32.totalorder %s17, 7
    %p273 = por %p271, %p272
    %p274 = scmp.ne.s32.totalorder %s266, %s269
    %p275 = scmp.eq.s32.totalorder %s17, 0
    %p276 = por %p274, %p275
    %p277 = scmp.ne.s32.totalorder %s266, %s269
    %p278 = scmp.eq.s32.totalorder %s22, 7
    %p279 = por %p277, %p278
    %p280 = scmp.ne.s32.totalorder %s269, %s270
    %p281 = scmp.eq.s32.totalorder %s22, 0
    %p282 = por %p280, %p281
    %p283 = scmp.ne.s32.totalorder %s269, %s270
    %p284 = scmp.eq.s32.totalorder %s23, 7
    %p285 = por %p283, %p284
    %p287 = scmp.ne.s32.totalorder %s270, %s286
    %p288 = scmp.eq.s32.totalorder %s23, 0
    %p289 = por %p287, %p288
    %p290 = scmp.le.s32.totalorder 1, %s17
    %p291 = scmp.lt.s32.totalorder %s17, 9
    %p292 = pnand %p290, %p291
    %p293 = pneg %p292
    // Predicated region
    $region9: #{_lambda_.2} parent=5 // pred_check
      _
    $region10: #{_lambda_.2} parent=5 // pred_check_branch
      %295 = sbr.rel (%p292) target = $region12
    $region11: #{_lambda_.2} parent=5 // pred_region
      %s296 = ssub.s32 %s17, 1
      // Predicated region
      $region13: #{_lambda_.2} parent=11 // pred_check
        %p297 = pneg %p104
      $region14: #{_lambda_.2} parent=11 // pred_check_branch
        %299 = sbr.rel (%p297) target = $region16
      $region15: #{_lambda_.2} parent=11 // pred_region
        _
      $region16: #{_lambda_.2} parent=11 // pred_fallthru
        _
      // Predicated region
      $region17: #{_lambda_.2} parent=11 // pred_check
        %p300 = pneg %p125
      $region18: #{_lambda_.2} parent=11 // pred_check_branch
        %302 = sbr.rel (%p300) target = $region20
      $region19: #{_lambda_.2} parent=11 // pred_region
        _
      $region20: #{_lambda_.2} parent=11 // pred_fallthru
        _
      // Predicated region
      $region21: #{_lambda_.2} parent=11 // pred_check
        %p303 = pneg %p146
      $region22: #{_lambda_.2} parent=11 // pred_check_branch
        %305 = sbr.rel (%p303) target = $region24
      $region23: #{_lambda_.2} parent=11 // pred_region
        _
      $region24: #{_lambda_.2} parent=11 // pred_fallthru
        _
      // Predicated region
      $region25: #{_lambda_.2} parent=11 // pred_check
        %p306 = pneg %p167
      $region26: #{_lambda_.2} parent=11 // pred_check_branch
        %308 = sbr.rel (%p306) target = $region28
      $region27: #{_lambda_.2} parent=11 // pred_region
        _
      $region28: #{_lambda_.2} parent=11 // pred_fallthru
        _
      // Predicated region
      $region29: #{_lambda_.2} parent=11 // pred_check
        %p309 = pneg %p188
      $region30: #{_lambda_.2} parent=11 // pred_check_branch
        %311 = sbr.rel (%p309) target = $region32
      $region31: #{_lambda_.2} parent=11 // pred_region
        _
      $region32: #{_lambda_.2} parent=11 // pred_fallthru
        _
      // Predicated region
      $region33: #{_lambda_.2} parent=11 // pred_check
        %p312 = pneg %p209
      $region34: #{_lambda_.2} parent=11 // pred_check_branch
        %314 = sbr.rel (%p312) target = $region36
      $region35: #{_lambda_.2} parent=11 // pred_region
        _
      $region36: #{_lambda_.2} parent=11 // pred_fallthru
        _
      // Predicated region
      $region37: #{_lambda_.2} parent=11 // pred_check
        %p315 = pneg %p230
      $region38: #{_lambda_.2} parent=11 // pred_check_branch
        %317 = sbr.rel (%p315) target = $region40
      $region39: #{_lambda_.2} parent=11 // pred_region
        _
      $region40: #{_lambda_.2} parent=11 // pred_fallthru
        _
    $region12: #{_lambda_.2} parent=5 // pred_fallthru
      _
    %p318 = scmp.lt.s32.totalorder %s17, 8
    // Predicated region
    $region41: #{_lambda_.2} parent=5 // pred_check
      %p319 = pneg %p318
    $region42: #{_lambda_.2} parent=5 // pred_check_branch
      %321 = sbr.rel (%p319) target = $region44
    $region43: #{_lambda_.2} parent=5 // pred_region
      // Predicated region
      $region45: #{_lambda_.2} parent=43 // pred_check
        %p322 = pneg %p51
      $region46: #{_lambda_.2} parent=43 // pred_check_branch
        %324 = sbr.rel (%p322) target = $region48
      $region47: #{_lambda_.2} parent=43 // pred_region
        %s325 = smul.u32 2, %s25
        %p326 = scmp.lt.s32.totalorder %s24, 1
        %s327 = scalar_select %p326, %s24, 1
        %p328 = scmp.lt.s32.totalorder %s325, 7
        %s329 = scalar_select %p328, %s325, 7
        %s330 = smul.addr %s327, 8
        %s331 = sadd.s32 %s329, %s330
        %s332 = smul.addr %s331, 8
        %s333 = scalar_lea.vmem %s0, %s332
        %s334 = smul.u32 2, %s25
      $region48: #{_lambda_.2} parent=43 // pred_fallthru
        _
      // Predicated region
      $region49: #{_lambda_.2} parent=43 // pred_check
        %p335 = pneg %p77
      $region50: #{_lambda_.2} parent=43 // pred_check_branch
        %337 = sbr.rel (%p335) target = $region52
      $region51: #{_lambda_.2} parent=43 // pred_region
        %s338 = smul.u32 32, %s25
        %p339 = scmp.lt.s32.totalorder %s338, 127
        %s340 = scalar_select %p339, %s338, 127
        %s341 = smul.addr %s340, 4
        %s342 = scalar_lea.vmem %s1, %s341
        %s343 = smul.u32 32, %s25
      $region52: #{_lambda_.2} parent=43 // pred_fallthru
        _
    $region44: #{_lambda_.2} parent=5 // pred_fallthru
      _
    %p344 = scmp.le.s32.totalorder 1, %s17
    %p345 = scmp.lt.s32.totalorder %s17, 9
    %p346 = pnand %p344, %p345
    %p347 = pneg %p346
    // Predicated region
    $region53: #{_lambda_.2} parent=5 // pred_check
      _
    $region54: #{_lambda_.2} parent=5 // pred_check_branch
      %349 = sbr.rel (%p346) target = $region56
    $region55: #{_lambda_.2} parent=5 // pred_region
      %s350 = ssub.s32 %s17, 1
      %s351 = smul.u32 2, %s27
      %p352 = scmp.lt.s32.totalorder %s26, 1
      %s353 = scalar_select %p352, %s26, 1
      %p354 = scmp.lt.s32.totalorder %s351, 7
      %s355 = scalar_select %p354, %s351, 7
      %s356 = smul.addr %s353, 8
      %s357 = sadd.s32 %s355, %s356
      %s358 = smul.addr %s357, 8
      %s359 = scalar_lea.vmem %s0, %s358
      %p360 = pneg %p57
      %p361 = pneg %p54
      %s362 = smul.u32 32, %s27
      %p363 = scmp.lt.s32.totalorder %s362, 127
      %s364 = scalar_select %p363, %s362, 127
      %s365 = smul.addr %s364, 4
      %s366 = scalar_lea.vmem %s1, %s365
      %p367 = pneg %p83
      %p368 = pneg %p80
      %p369 = pneg %p104
      %p370 = pneg %p101
      %p371 = pneg %p125
      %p372 = pneg %p122
      %p373 = pneg %p146
      %p374 = pneg %p143
      %p375 = pneg %p167
      %p376 = pneg %p164
      %p377 = pneg %p188
      %p378 = pneg %p185
      %p379 = pneg %p209
      %p380 = pneg %p206
      %p381 = pneg %p230
      %p382 = pneg %p227
      %p383 = pneg %p256
      %p384 = pneg %p253
      %p385 = scmp.lt.s32.totalorder %s26, 1
      %s386 = scalar_select %p385, %s26, 1
      %s387 = smul.addr %s386, 8
      %s388 = scalar_lea.vmem %s9, %s387
      %p389 = pneg %p282
      %p390 = pneg %p279
      %p391 = scmp.lt.s32.totalorder %s26, 1
      %s392 = scalar_select %p391, %s26, 1
      %s393 = smul.addr %s392, 4
      %s394 = scalar_lea.vmem %s10, %s393
      %s395 = smul.u32 2, %s27
      %p396 = scmp.lt.s32.totalorder %s26, 1
      %s397 = scalar_select %p396, %s26, 1
      %p398 = scmp.lt.s32.totalorder %s395, 7
      %s399 = scalar_select %p398, %s395, 7
      %s400 = smul.addr %s397, 8
      %s401 = sadd.s32 %s399, %s400
      %s402 = smul.addr %s401, 8
      %s403 = scalar_lea.vmem %s0, %s402
      %s404 = smul.u32 2, %s27
      %s405 = smul.u32 32, %s27
      %p406 = scmp.lt.s32.totalorder %s405, 127
      %s407 = scalar_select %p406, %s405, 127
      %s408 = smul.addr %s407, 4
      %s409 = scalar_lea.vmem %s1, %s408
      %s410 = smul.u32 32, %s27
      %p411 = scmp.lt.s32.totalorder %s26, 1
      %s412 = scalar_select %p411, %s26, 1
      %s413 = smul.addr %s412, 8
      %s414 = scalar_lea.vmem %s9, %s413
      %p415 = scmp.lt.s32.totalorder %s26, 1
      %s416 = scalar_select %p415, %s26, 1
      %s417 = smul.addr %s416, 4
      %s418 = scalar_lea.vmem %s10, %s417
      %p419 = scmp.eq.s32.totalorder %s27, 0
      // Predicated region
      $region57: #{_lambda_.2} parent=55 // pred_check
        %p420 = pneg %p419
      $region58: #{_lambda_.2} parent=55 // pred_check_branch
        %422 = sbr.rel (%p420) target = $region60
      $region59: #{_lambda_.2} parent=55 // pred_region
        %423 = vst [vmem:[#allocation2] sm:$0xff] 0.0
        %vm424 = vcmask 7168
        %425 = vst.msk [vmem:[#allocation3] sm:$0xff] %vm424, 0.0
      $region60: #{_lambda_.2} parent=55 // pred_fallthru
        _
      %v426 = vld [vmem:[%s403] sm:$0xff]
      %v427 = vld [vmem:[%s403 + $0x8] sm:$0xff]
      %v428 = vld [vmem:[#allocation2] sm:$0xff]
      %v429 = vpack.c.bf16 %v426, %v426
      %v430 = vpack.c.bf16 %v427, %v427
      %v431 = vld [vmem:[%s409] sm:$0xf]
      %v432 = vld [vmem:[%s409 + $0x4] sm:$0xf]
      %v433 = vld [vmem:[%s409 + $0x8] sm:$0xf]
      %v434 = vld [vmem:[%s409 + $0xc] sm:$0xf]
      %v435 = vld [vmem:[%s409 + $0x10] sm:$0xf]
      %v436 = vld [vmem:[%s409 + $0x14] sm:$0xf]
      %v437 = vld [vmem:[%s409 + $0x18] sm:$0xf]
      %v438 = vld [vmem:[%s409 + $0x1c] sm:$0xf]
      %v439 = vld [vmem:[%s409 + $0x20] sm:$0xf]
      %v440 = vld [vmem:[%s409 + $0x24] sm:$0xf]
      %v441 = vld [vmem:[%s409 + $0x28] sm:$0xf]
      %v442 = vld [vmem:[%s409 + $0x2c] sm:$0xf]
      %v443 = vld [vmem:[%s409 + $0x30] sm:$0xf]
      %v444 = vld [vmem:[%s409 + $0x34] sm:$0xf]
      %v445 = vld [vmem:[%s409 + $0x38] sm:$0xf]
      %v446 = vld [vmem:[%s409 + $0x3c] sm:$0xf]
      %v447 = vld [vmem:[%s409 + $0x40] sm:$0xf]
      %v448 = vld [vmem:[%s409 + $0x44] sm:$0xf]
      %v449 = vld [vmem:[%s409 + $0x48] sm:$0xf]
      %v450 = vld [vmem:[%s409 + $0x4c] sm:$0xf]
      %v451 = vld [vmem:[%s409 + $0x50] sm:$0xf]
      %v452 = vld [vmem:[%s409 + $0x54] sm:$0xf]
      %v453 = vld [vmem:[%s409 + $0x58] sm:$0xf]
      %v454 = vld [vmem:[%s409 + $0x5c] sm:$0xf]
      %v455 = vld [vmem:[%s409 + $0x60] sm:$0xf]
      %v456 = vld [vmem:[%s409 + $0x64] sm:$0xf]
      %v457 = vld [vmem:[%s409 + $0x68] sm:$0xf]
      %v458 = vld [vmem:[%s409 + $0x6c] sm:$0xf]
      %v459 = vld [vmem:[%s409 + $0x70] sm:$0xf]
      %v460 = vld [vmem:[%s409 + $0x74] sm:$0xf]
      %v461 = vld [vmem:[%s409 + $0x78] sm:$0xf]
      %v462 = vld [vmem:[%s409 + $0x7c] sm:$0xf]
      %v495 = vunpack.c.l.b16 %v431
      %v496 = vunpack.c.l.b16 %v432
      %v497 = vunpack.c.l.b16 %v433
      %v498 = vunpack.c.l.b16 %v434
      %v499 = vunpack.c.l.b16 %v435
      %v500 = vunpack.c.l.b16 %v436
      %v501 = vunpack.c.l.b16 %v437
      %v502 = vunpack.c.l.b16 %v438
      %v503 = vunpack.c.l.b16 %v439
      %v504 = vunpack.c.l.b16 %v440
      %v505 = vunpack.c.l.b16 %v441
      %v506 = vunpack.c.l.b16 %v442
      %v507 = vunpack.c.l.b16 %v443
      %v508 = vunpack.c.l.b16 %v444
      %v509 = vunpack.c.l.b16 %v445
      %v510 = vunpack.c.l.b16 %v446
      %v511 = vunpack.c.l.b16 %v447
      %v512 = vunpack.c.l.b16 %v448
      %v513 = vunpack.c.l.b16 %v449
      %v514 = vunpack.c.l.b16 %v450
      %v515 = vunpack.c.l.b16 %v451
      %v516 = vunpack.c.l.b16 %v452
      %v517 = vunpack.c.l.b16 %v453
      %v518 = vunpack.c.l.b16 %v454
      %v519 = vunpack.c.l.b16 %v455
      %v520 = vunpack.c.l.b16 %v456
      %v521 = vunpack.c.l.b16 %v457
      %v522 = vunpack.c.l.b16 %v458
      %v523 = vunpack.c.l.b16 %v459
      %v524 = vunpack.c.l.b16 %v460
      %v525 = vunpack.c.l.b16 %v461
      %v526 = vunpack.c.l.b16 %v462
      %v527 = vpack.c.b16 %v496, %v495
      %v528 = vpack.c.b16 %v498, %v497
      %v529 = vpack.c.b16 %v500, %v499
      %v530 = vpack.c.b16 %v502, %v501
      %v531 = vpack.c.b16 %v504, %v503
      %v532 = vpack.c.b16 %v506, %v505
      %v533 = vpack.c.b16 %v508, %v507
      %v534 = vpack.c.b16 %v510, %v509
      %v535 = vpack.c.b16 %v512, %v511
      %v536 = vpack.c.b16 %v514, %v513
      %v537 = vpack.c.b16 %v516, %v515
      %v538 = vpack.c.b16 %v518, %v517
      %v539 = vpack.c.b16 %v520, %v519
      %v540 = vpack.c.b16 %v522, %v521
      %v541 = vpack.c.b16 %v524, %v523
      %v542 = vpack.c.b16 %v526, %v525
      %559 = vmatpush.bf16.msra.mxu0 %v534
      %560 = vmatpush.bf16.msra.mxu0 %v533
      %561 = vmatpush.bf16.msra.mxu0 %v532
      %562 = vmatpush.bf16.msra.mxu0 %v531
      %563 = vmatpush.bf16.msra.mxu0 %v530
      %564 = vmatpush.bf16.msra.mxu0 %v529
      %565 = vmatpush.bf16.msra.mxu0 %v528
      %566 = vmatpush.bf16.msra.mxu0 %v527
      %567 = vmatmul.bf16.gmra.mxu0 %v429
      %v568 = vpop.f32.mrf.mxu0
      %v569 = vadd.f32 0.0, %v568
      %v570 = vpop.f32.mrf.mxu0
      %571 = vdwg.mxu0
      %572 = vmatpush.bf16.msra.mxu0 %v542
      %573 = vmatpush.bf16.msra.mxu0 %v541
      %574 = vmatpush.bf16.msra.mxu0 %v540
      %575 = vmatpush.bf16.msra.mxu0 %v539
      %576 = vmatpush.bf16.msra.mxu0 %v538
      %577 = vmatpush.bf16.msra.mxu0 %v537
      %578 = vmatpush.bf16.msra.mxu0 %v536
      %579 = vmatpush.bf16.msra.mxu0 %v535
      %580 = vmatmul.bf16.gmra.mxu0 %v430
      %v581 = vpop.f32.mrf.mxu0
      %v582 = vadd.f32 %v569, %v581
      %v583 = vpop.f32.mrf.mxu0
      %584 = vdwg.mxu0
      %v585 = vadd.f32 %v428, %v582
      %586 = vst [vmem:[#allocation2] sm:$0xff] %v585
      %v587 = vld [vmem:[#allocation3] sm:$0xff]
      %v588 = vmul.f32 %v426, %v426
      %v589 = vmul.f32 %v427, %v427
      %v590 = vadd.f32 %v588, %v589
      %591 = vadd.xlane.f32.xlu0 %v590
      %v592 = vpop.xlane.xlu0 %591
      %v593 = vadd.f32 %v587, %v592
      %vm594 = vcmask 7168
      %595 = vst.msk [vmem:[#allocation3] sm:$0xff] %vm594, %v593
      %p596 = scmp.eq.s32.totalorder %s27, 3
      // Predicated region
      $region61: #{_lambda_.2} parent=55 // pred_check
        %p597 = pneg %p596
      $region62: #{_lambda_.2} parent=55 // pred_check_branch
        %599 = sbr.rel (%p597) target = $region64
      $region63: #{_lambda_.2} parent=55 // pred_region
        %v600 = vld [vmem:[#allocation3] sm:$0xff]
        %v601 = vmax.f32 %v600, 1e-24
        %v602 = vrsqrt.pop %v601
        %v603 = vmul.f32 %v602, %v601
        %v604 = vmul.f32 %v603, %v602
        %v605 = vmul.f32 0.5, %v604
        %v606 = vsub.f32 1.5, %v605
        %v607 = vmul.f32 %v602, %v606
        %vm608 = vweird.f32 %v601
        %vm609 = vweird.f32 %v602
        %vm610 = vmor %vm608, %vm609
        %v611 = vsel %vm610, %v602, %v607
        %v612 = vld [vmem:[#allocation2] sm:$0xff]
        %614 = vset.pattern.permute.xlu0 0
        %615 = vperm.xlu0 %614, %v611
        %v616 = vpop.permute.xlu0 %615
        %v618 = vmul.f32 %v612, %v616
        %v619 = vld [vmem:[%s2] sm:$0x1]
        %v621 = vperm.slane %v619, 0
        %v623 = vadd.f32 %v618, %v621
        %v624 = vtanh.pop %v623
        %v625 = vld [vmem:[%s3] sm:$0xff]
        %v626 = vld [vmem:[%s3 + $0x8] sm:$0xff]
        %v627 = vld [vmem:[%s3 + $0x10] sm:$0xff]
        %v628 = vld [vmem:[%s3 + $0x18] sm:$0xff]
        %v629 = vld [vmem:[%s3 + $0x20] sm:$0xff]
        %v630 = vld [vmem:[%s3 + $0x28] sm:$0xff]
        %v631 = vld [vmem:[%s3 + $0x30] sm:$0xff]
        %v632 = vld [vmem:[%s3 + $0x38] sm:$0xff]
        %v633 = vld [vmem:[%s3 + $0x40] sm:$0xff]
        %v634 = vld [vmem:[%s3 + $0x48] sm:$0xff]
        %v635 = vld [vmem:[%s3 + $0x50] sm:$0xff]
        %v636 = vld [vmem:[%s3 + $0x58] sm:$0xff]
        %v637 = vld [vmem:[%s3 + $0x60] sm:$0xff]
        %v638 = vld [vmem:[%s3 + $0x68] sm:$0xff]
        %v639 = vld [vmem:[%s3 + $0x70] sm:$0xff]
        %v640 = vld [vmem:[%s3 + $0x78] sm:$0xff]
        %v641 = vld [vmem:[%s5] sm:$0x1]
        %v643 = vperm.slane %v641, 0
        %645 = vmatpush.msra.mxu0 %v640
        %646 = vmatpush.msra.mxu0 %v639
        %647 = vmatpush.msra.mxu0 %v638
        %648 = vmatpush.msra.mxu0 %v637
        %649 = vmatpush.msra.mxu0 %v636
        %650 = vmatpush.msra.mxu0 %v635
        %651 = vmatpush.msra.mxu0 %v634
        %652 = vmatpush.msra.mxu0 %v633
        %653 = vmatpush.msra.mxu0 %v632
        %654 = vmatpush.msra.mxu0 %v631
        %655 = vmatpush.msra.mxu0 %v630
        %656 = vmatpush.msra.mxu0 %v629
        %657 = vmatpush.msra.mxu0 %v628
        %658 = vmatpush.msra.mxu0 %v627
        %659 = vmatpush.msra.mxu0 %v626
        %660 = vmatpush.msra.mxu0 %v625
        %661 = vmatmul.f32.gmra.mxu0 %v624
        %v662 = vpop.f32.mrf.mxu0
        %v663 = vadd.f32 %v643, %v662
        %664 = vdwg.mxu0
        %v665 = vld [vmem:[%s4] sm:$0xff]
        %v666 = vld [vmem:[%s4 + $0x8] sm:$0xff]
        %v667 = vld [vmem:[%s4 + $0x10] sm:$0xff]
        %v668 = vld [vmem:[%s4 + $0x18] sm:$0xff]
        %v669 = vld [vmem:[%s4 + $0x20] sm:$0xff]
        %v670 = vld [vmem:[%s4 + $0x28] sm:$0xff]
        %v671 = vld [vmem:[%s4 + $0x30] sm:$0xff]
        %v672 = vld [vmem:[%s4 + $0x38] sm:$0xff]
        %v673 = vld [vmem:[%s4 + $0x40] sm:$0xff]
        %v674 = vld [vmem:[%s4 + $0x48] sm:$0xff]
        %v675 = vld [vmem:[%s4 + $0x50] sm:$0xff]
        %v676 = vld [vmem:[%s4 + $0x58] sm:$0xff]
        %v677 = vld [vmem:[%s4 + $0x60] sm:$0xff]
        %v678 = vld [vmem:[%s4 + $0x68] sm:$0xff]
        %v679 = vld [vmem:[%s4 + $0x70] sm:$0xff]
        %v680 = vld [vmem:[%s4 + $0x78] sm:$0xff]
        %v681 = vld [vmem:[%s6] sm:$0x1]
        %v683 = vperm.slane %v681, 0
        %685 = vmatpush.msra.mxu0 %v680
        %686 = vmatpush.msra.mxu0 %v679
        %687 = vmatpush.msra.mxu0 %v678
        %688 = vmatpush.msra.mxu0 %v677
        %689 = vmatpush.msra.mxu0 %v676
        %690 = vmatpush.msra.mxu0 %v675
        %691 = vmatpush.msra.mxu0 %v674
        %692 = vmatpush.msra.mxu0 %v673
        %693 = vmatpush.msra.mxu0 %v672
        %694 = vmatpush.msra.mxu0 %v671
        %695 = vmatpush.msra.mxu0 %v670
        %696 = vmatpush.msra.mxu0 %v669
        %697 = vmatpush.msra.mxu0 %v668
        %698 = vmatpush.msra.mxu0 %v667
        %699 = vmatpush.msra.mxu0 %v666
        %700 = vmatpush.msra.mxu0 %v665
        %701 = vmatmul.f32.gmra.mxu0 %v624
        %v702 = vpop.f32.mrf.mxu0
        %v703 = vadd.f32 %v683, %v702
        %704 = vdwg.mxu0
        %706 = vrot.lane.b32.xlu0 %v703, 64
        %v707 = vpop.permute.xlu0 %706
        %vm709 = vcmask 523264
        %v710 = vsel %vm709, %v663, %v707
        %711 = vst [vmem:[%s414] sm:$0xff] %v710
        %v712 = vld [vmem:[%s7] sm:$0xff]
        %v713 = vld [vmem:[%s7 + $0x8] sm:$0xff]
        %v714 = vld [vmem:[%s7 + $0x10] sm:$0xff]
        %v715 = vld [vmem:[%s7 + $0x18] sm:$0xff]
        %v716 = vld [vmem:[%s7 + $0x20] sm:$0xff]
        %v717 = vld [vmem:[%s7 + $0x28] sm:$0xff]
        %v718 = vld [vmem:[%s7 + $0x30] sm:$0xff]
        %v719 = vld [vmem:[%s7 + $0x38] sm:$0xff]
        %v720 = vld [vmem:[%s8] sm:$0x1]
        %v722 = vperm.slane %v720, 0
        %v725 = vsel %vm709, %v663, 0
        %727 = vmatpush.msra.mxu0 0.0
        %728 = vmatpush.msra.mxu0 0.0
        %729 = vmatpush.msra.mxu0 0.0
        %730 = vmatpush.msra.mxu0 0.0
        %731 = vmatpush.msra.mxu0 0.0
        %732 = vmatpush.msra.mxu0 0.0
        %733 = vmatpush.msra.mxu0 0.0
        %734 = vmatpush.msra.mxu0 0.0
        %735 = vmatpush.msra.mxu0 %v719
        %736 = vmatpush.msra.mxu0 %v718
        %737 = vmatpush.msra.mxu0 %v717
        %738 = vmatpush.msra.mxu0 %v716
        %739 = vmatpush.msra.mxu0 %v715
        %740 = vmatpush.msra.mxu0 %v714
        %741 = vmatpush.msra.mxu0 %v713
        %742 = vmatpush.msra.mxu0 %v712
        %743 = vmatmul.f32.gmra.mxu0 %v725
        %v744 = vpop.f32.mrf.mxu0
        %v745 = vadd.f32 %v722, %v744
        %746 = vdwg.mxu0
        %v747 = vtanh.pop %v745
        %v748 = vpack.c.bf16 %v747, %v747
        %749 = vst [vmem:[%s418] sm:$0xf] %v748
      $region64: #{_lambda_.2} parent=55 // pred_fallthru
        _
      %p750 = scmp.lt.s32.totalorder %s26, 1
      %s751 = scalar_select %p750, %s26, 1
      %s752 = smul.addr %s751, 8
      %s753 = scalar_lea.vmem %s9, %s752
      %p754 = scmp.lt.s32.totalorder %s26, 1
      %s755 = scalar_select %p754, %s26, 1
      %s756 = smul.addr %s755, 4
      %s757 = scalar_lea.vmem %s10, %s756
      // Predicated region
      $region65: #{_lambda_.2} parent=55 // pred_check
        %p758 = pneg %p253
      $region66: #{_lambda_.2} parent=55 // pred_check_branch
        %760 = sbr.rel (%p758) target = $region68
      $region67: #{_lambda_.2} parent=55 // pred_region
        _
      $region68: #{_lambda_.2} parent=55 // pred_fallthru
        _
      // Predicated region
      $region69: #{_lambda_.2} parent=55 // pred_check
        %p761 = pneg %p279
      $region70: #{_lambda_.2} parent=55 // pred_check_branch
        %763 = sbr.rel (%p761) target = $region72
      $region71: #{_lambda_.2} parent=55 // pred_region
        _
      $region72: #{_lambda_.2} parent=55 // pred_fallthru
        _
    $region56: #{_lambda_.2} parent=5 // pred_fallthru
      _
    %p764 = scmp.le.s32.totalorder 2, %s17
    // Predicated region
    $region73: #{_lambda_.2} parent=5 // pred_check
      %p765 = pneg %p764
    $region74: #{_lambda_.2} parent=5 // pred_check_branch
      %767 = sbr.rel (%p765) target = $region76
    $region75: #{_lambda_.2} parent=5 // pred_region
      %s768 = ssub.s32 %s17, 2
      // Predicated region
      $region77: #{_lambda_.2} parent=75 // pred_check
        %p769 = pneg %p259
      $region78: #{_lambda_.2} parent=75 // pred_check_branch
        %771 = sbr.rel (%p769) target = $region80
      $region79: #{_lambda_.2} parent=75 // pred_region
        %p772 = scmp.lt.s32.totalorder %s28, 1
        %s773 = scalar_select %p772, %s28, 1
        %s774 = smul.addr %s773, 8
        %s775 = scalar_lea.vmem %s9, %s774
      $region80: #{_lambda_.2} parent=75 // pred_fallthru
        _
      // Predicated region
      $region81: #{_lambda_.2} parent=75 // pred_check
        %p776 = pneg %p285
      $region82: #{_lambda_.2} parent=75 // pred_check_branch
        %778 = sbr.rel (%p776) target = $region84
      $region83: #{_lambda_.2} parent=75 // pred_region
        %p779 = scmp.lt.s32.totalorder %s28, 1
        %s780 = scalar_select %p779, %s28, 1
        %s781 = smul.addr %s780, 4
        %s782 = scalar_lea.vmem %s10, %s781
      $region84: #{_lambda_.2} parent=75 // pred_fallthru
        _
    $region76: #{_lambda_.2} parent=5 // pred_fallthru
      _
  $region6: #{_lambda_.2} parent=0 // loop_footer
    %s21 = sadd.s32 1, %s17
  $region7: #{_lambda_.2} parent=0 // loop_footer_branch
    %16 = sbr.rel target = $region3
  $region8: #{_lambda_.2} parent=0 // loop_exit
    _

// kernel: _lambda_.3
$region0: #{_lambda_.3}
  #allocation0 [shape = 'u32[]', space=smem, size = 0x4, offset = 0x4, fixed_abs, tag = 'smem constant byte address 0x4 - core index']
  #allocation1 [shape = 'u32[72,128]{1,0:T(1,128)}', space=vmem, size = 0x9000, scoped, tag = 'internal scratch']
  %s0 = inlined_call_operand.vmem [shape: bf16[16,128], index: 0, kind: input, shape index: {}]
  %s1 = inlined_call_operand.vmem [shape: bf16[128,1024], index: 1, kind: input, shape index: {}]
  %s2 = inlined_call_operand.vmem [shape: f32[1,1024], index: 2, kind: input, shape index: {}]
  %s3 = inlined_call_operand.hbm [shape: f32[16,1024], index: 3, kind: output, shape index: {}]
  %s4 = sld [smem:[#allocation0]]
  $region83: #{_lambda_.3} parent=0
    _
  %s6 = ssub.s32 1, %s4
  %s7 = scalar_select 0, %s6, %s4
  $region1: #{_lambda_.3} parent=0
    #allocation2 [shape = 'u8[131072]{0}', space=vmem, size = 0x20000, scoped, tag = 'input window, operand 1']
    #allocation3 [shape = 'u8[16384]{0}', space=vmem, size = 0x4000, scoped, tag = 'output window, operand 0']
    #allocation4 [shape = 's32[2]{0}', space=sflag, size = 0x8, scoped, tag = 'scoped memory for _lambda_.3']
    %8 = vsyncpa [#allocation4], 0
    %s9 = scalar_lea.sflag [#allocation4], 1
    %10 = vsyncpa %s9, 0
    loop: start=0, step=1, limit=10
    $region2: #{_lambda_.3} parent=1 // loop_pre_header
      _
    $region3: #{_lambda_.3} parent=1 // loop_header
      %s12 = sphi 0, %s16
      %p13 = scmp.ge.s32.totalorder %s12, 10
      %s19 = sphi 0, %s31
      %s20 = sphi 0, %s27
      %s21 = sphi 0, %s19
      %s22 = sphi 0, %s20
      %s23 = sphi 0, %s21
      %s24 = sphi 0, %s22
      %s34 = sphi 0, %s36
      %s37 = sphi 0, %s34
      %s38 = sphi 0, %s37
      %s54 = sphi 0, %s38
      %s60 = sphi 0, %s62
      %s63 = sphi 0, %s60
      %s64 = sphi 0, %s63
      %s80 = sphi 0, %s64
      %s86 = sphi 0, %s88
      %s89 = sphi 0, %s86
      %s90 = sphi 0, %s89
      %s106 = sphi 0, %s90
      %s114 = sphi 0, %s116
      %s117 = sphi 0, %s114
      %s118 = sphi 0, %s117
      %s134 = sphi 0, %s118
    $region4: #{_lambda_.3} parent=1 // loop_header_branch
      %15 = sbr.rel (%p13) target = $region8
    $region5: #{_lambda_.3} parent=1 // loop_body
      %s17 = ssub.s32 %s12, 1
      %s18 = ssub.s32 %s12, 2
      %s25 = sadd.s32 1, %s20
      %p26 = scmp.ge.s32.totalorder %s25, 4
      %s27 = scalar_select %p26, 0, %s25
      %s28 = sadd.s32 1, %s19
      %s29 = scalar_select %p26, %s28, %s19
      %p30 = scmp.ge.s32.totalorder %s29, 2
      %s31 = scalar_select %p30, 0, %s29
      %s32 = ssub.s32 %s19, %s31
      %p33 = scmp.eq.s32.totalorder %s32, 0
      %s35 = sadd.s32 %s34, 1
      %s36 = scalar_select %p33, %s34, %s35
      %p39 = pneg %p33
      %p40 = scmp.eq.s32.totalorder %s12, 7
      %p41 = por %p39, %p40
      %p42 = scmp.ne.s32.totalorder %s34, %s37
      %p43 = scmp.eq.s32.totalorder %s12, 0
      %p44 = por %p42, %p43
      %p45 = scmp.ne.s32.totalorder %s34, %s37
      %p46 = scmp.eq.s32.totalorder %s17, 7
      %p47 = por %p45, %p46
      %p48 = scmp.ne.s32.totalorder %s37, %s38
      %p49 = scmp.eq.s32.totalorder %s17, 0
      %p50 = por %p48, %p49
      %p51 = scmp.ne.s32.totalorder %s37, %s38
      %p52 = scmp.eq.s32.totalorder %s18, 7
      %p53 = por %p51, %p52
      %p55 = scmp.ne.s32.totalorder %s38, %s54
      %p56 = scmp.eq.s32.totalorder %s18, 0
      %p57 = por %p55, %p56
      %s58 = ssub.s32 %s20, %s27
      %p59 = scmp.eq.s32.totalorder %s58, 0
      %s61 = sadd.s32 %s60, 1
      %s62 = scalar_select %p59, %s60, %s61
      %p65 = pneg %p59
      %p66 = scmp.eq.s32.totalorder %s12, 7
      %p67 = por %p65, %p66
      %p68 = scmp.ne.s32.totalorder %s60, %s63
      %p69 = scmp.eq.s32.totalorder %s12, 0
      %p70 = por %p68, %p69
      %p71 = scmp.ne.s32.totalorder %s60, %s63
      %p72 = scmp.eq.s32.totalorder %s17, 7
      %p73 = por %p71, %p72
      %p74 = scmp.ne.s32.totalorder %s63, %s64
      %p75 = scmp.eq.s32.totalorder %s17, 0
      %p76 = por %p74, %p75
      %p77 = scmp.ne.s32.totalorder %s63, %s64
      %p78 = scmp.eq.s32.totalorder %s18, 7
      %p79 = por %p77, %p78
      %p81 = scmp.ne.s32.totalorder %s64, %s80
      %p82 = scmp.eq.s32.totalorder %s18, 0
      %p83 = por %p81, %p82
      %s84 = ssub.s32 %s20, %s27
      %p85 = scmp.eq.s32.totalorder %s84, 0
      %s87 = sadd.s32 %s86, 1
      %s88 = scalar_select %p85, %s86, %s87
      %p91 = pneg %p85
      %p92 = scmp.eq.s32.totalorder %s12, 7
      %p93 = por %p91, %p92
      %p94 = scmp.ne.s32.totalorder %s86, %s89
      %p95 = scmp.eq.s32.totalorder %s12, 0
      %p96 = por %p94, %p95
      %p97 = scmp.ne.s32.totalorder %s86, %s89
      %p98 = scmp.eq.s32.totalorder %s17, 7
      %p99 = por %p97, %p98
      %p100 = scmp.ne.s32.totalorder %s89, %s90
      %p101 = scmp.eq.s32.totalorder %s17, 0
      %p102 = por %p100, %p101
      %p103 = scmp.ne.s32.totalorder %s89, %s90
      %p104 = scmp.eq.s32.totalorder %s18, 7
      %p105 = por %p103, %p104
      %p107 = scmp.ne.s32.totalorder %s90, %s106
      %p108 = scmp.eq.s32.totalorder %s18, 0
      %p109 = por %p107, %p108
      %s110 = ssub.s32 %s19, %s31
      %s111 = ssub.s32 %s20, %s27
      %s112 = sor.u32 %s110, %s111
      %p113 = scmp.eq.s32.totalorder %s112, 0
      %s115 = sadd.s32 %s114, 1
      %s116 = scalar_select %p113, %s114, %s115
      %p119 = pneg %p113
      %p120 = scmp.eq.s32.totalorder %s12, 7
      %p121 = por %p119, %p120
      %p122 = scmp.ne.s32.totalorder %s114, %s117
      %p123 = scmp.eq.s32.totalorder %s12, 0
      %p124 = por %p122, %p123
      %p125 = scmp.ne.s32.totalorder %s114, %s117
      %p126 = scmp.eq.s32.totalorder %s17, 7
      %p127 = por %p125, %p126
      %p128 = scmp.ne.s32.totalorder %s117, %s118
      %p129 = scmp.eq.s32.totalorder %s17, 0
      %p130 = por %p128, %p129
      %p131 = scmp.ne.s32.totalorder %s117, %s118
      %p132 = scmp.eq.s32.totalorder %s18, 7
      %p133 = por %p131, %p132
      %p135 = scmp.ne.s32.totalorder %s118, %s134
      %p136 = scmp.eq.s32.totalorder %s18, 0
      %p137 = por %p135, %p136
      %p138 = scmp.le.s32.totalorder 1, %s12
      %p139 = scmp.lt.s32.totalorder %s12, 9
      %p140 = pnand %p138, %p139
      %p141 = pneg %p140
      // Predicated region
      $region9: #{_lambda_.3} parent=5 // pred_check
        _
      $region10: #{_lambda_.3} parent=5 // pred_check_branch
        %143 = sbr.rel (%p140) target = $region12
      $region11: #{_lambda_.3} parent=5 // pred_region
        %s144 = ssub.s32 %s12, 1
      $region12: #{_lambda_.3} parent=5 // pred_fallthru
        _
      %p145 = scmp.lt.s32.totalorder %s12, 8
      // Predicated region
      $region13: #{_lambda_.3} parent=5 // pred_check
        %p146 = pneg %p145
      $region14: #{_lambda_.3} parent=5 // pred_check_branch
        %148 = sbr.rel (%p146) target = $region16
      $region15: #{_lambda_.3} parent=5 // pred_region
        // Predicated region
        $region17: #{_lambda_.3} parent=15 // pred_check
          %p149 = pneg %p44
        $region18: #{_lambda_.3} parent=15 // pred_check_branch
          %151 = sbr.rel (%p149) target = $region20
        $region19: #{_lambda_.3} parent=15 // pred_region
          %p152 = scmp.lt.s32.totalorder %s19, 1
          %s153 = scalar_select %p152, %s19, 1
          %s154 = smul.addr %s153, 4
          %s155 = scalar_lea.vmem %s0, %s154
        $region20: #{_lambda_.3} parent=15 // pred_fallthru
          _
        // Predicated region
        $region21: #{_lambda_.3} parent=15 // pred_check
          %p156 = pneg %p70
        $region22: #{_lambda_.3} parent=15 // pred_check_branch
          %158 = sbr.rel (%p156) target = $region24
        $region23: #{_lambda_.3} parent=15 // pred_region
          %s159 = sand.u32 %s60, 1
          %s160 = sand.u32 %s60, 1
          %s161 = smul.addr %s160, 128
          %s162 = scalar_lea.vmem [#allocation2], %s161
          %s163 = smul.u32 2, %s20
          %s164 = smul.addr %s163, 4
          %s165 = scalar_lea.vmem %s1, %s164
          // Predicated region
          $region25: #{_lambda_.3} parent=23 // pred_check
            _
          $region26: #{_lambda_.3} parent=23 // pred_check_branch
            %167 = sbr.rel (0) target = $region28
          $region27: #{_lambda_.3} parent=23 // pred_region
            // Predicated region
            $region29: #{_lambda_.3} parent=27 // pred_check
              _
            $region30: #{_lambda_.3} parent=27 // pred_check_branch
              %169 = sbr.rel (0) target = $region32
            $region31: #{_lambda_.3} parent=27 // pred_region
              // Predicated region
              $region44: #{_lambda_.3} parent=31 // pred_check
                _
              $region45: #{_lambda_.3} parent=31 // pred_check_branch
                %215 = sbr.rel (0) target = $region47
              $region46: #{_lambda_.3} parent=31 // pred_region
                loop: start=0, step=1, limit=1
                $region48: #{_lambda_.3} parent=46 // loop_pre_header
                  _
                $region49: #{_lambda_.3} parent=46 // loop_header
                  %s217 = sphi 0, %s221
                  %p218 = scmp.ge.s32.totalorder %s217, 1
                  %s222 = sphi %s165, %s165
                  %s223 = sphi %s162, %s162
                $region50: #{_lambda_.3} parent=46 // loop_header_branch
                  %220 = sbr.rel (%p218) target = $region54
                $region51: #{_lambda_.3} parent=46 // loop_body
                  %v224 = vld [vmem:[%s222] sm:$0xff]
                  %225 = vst [vmem:[%s223] sm:$0xff] %v224
                  %v226 = vld [vmem:[%s222 + $0x20] sm:$0xff]
                  %227 = vst [vmem:[%s223 + $0x8] sm:$0xff] %v226
                  %v228 = vld [vmem:[%s222 + $0x40] sm:$0xff]
                  %229 = vst [vmem:[%s223 + $0x10] sm:$0xff] %v228
                  %v230 = vld [vmem:[%s222 + $0x60] sm:$0xff]
                  %231 = vst [vmem:[%s223 + $0x18] sm:$0xff] %v230
                  %v232 = vld [vmem:[%s222 + $0x80] sm:$0xff]
                  %233 = vst [vmem:[%s223 + $0x20] sm:$0xff] %v232
                  %v234 = vld [vmem:[%s222 + $0xa0] sm:$0xff]
                  %235 = vst [vmem:[%s223 + $0x28] sm:$0xff] %v234
                  %v236 = vld [vmem:[%s222 + $0xc0] sm:$0xff]
                  %237 = vst [vmem:[%s223 + $0x30] sm:$0xff] %v236
                  %v238 = vld [vmem:[%s222 + $0xe0] sm:$0xff]
                  %239 = vst [vmem:[%s223 + $0x38] sm:$0xff] %v238
                  %v240 = vld [vmem:[%s222 + $0x100] sm:$0xff]
                  %241 = vst [vmem:[%s223 + $0x40] sm:$0xff] %v240
                  %v242 = vld [vmem:[%s222 + $0x120] sm:$0xff]
                  %243 = vst [vmem:[%s223 + $0x48] sm:$0xff] %v242
                  %v244 = vld [vmem:[%s222 + $0x140] sm:$0xff]
                  %245 = vst [vmem:[%s223 + $0x50] sm:$0xff] %v244
                  %v246 = vld [vmem:[%s222 + $0x160] sm:$0xff]
                  %247 = vst [vmem:[%s223 + $0x58] sm:$0xff] %v246
                  %v248 = vld [vmem:[%s222 + $0x180] sm:$0xff]
                  %249 = vst [vmem:[%s223 + $0x60] sm:$0xff] %v248
                  %v250 = vld [vmem:[%s222 + $0x1a0] sm:$0xff]
                  %251 = vst [vmem:[%s223 + $0x68] sm:$0xff] %v250
                  %v252 = vld [vmem:[%s222 + $0x1c0] sm:$0xff]
                  %253 = vst [vmem:[%s223 + $0x70] sm:$0xff] %v252
                  %v254 = vld [vmem:[%s222 + $0x1e0] sm:$0xff]
                  %255 = vst [vmem:[%s223 + $0x78] sm:$0xff] %v254
                $region52: #{_lambda_.3} parent=46 // loop_footer
                  %s221 = sadd.s32 1, %s217
                $region53: #{_lambda_.3} parent=46 // loop_footer_branch
                  %216 = sbr.rel target = $region49
                $region54: #{_lambda_.3} parent=46 // loop_exit
                  _
              $region47: #{_lambda_.3} parent=31 // pred_fallthru
                _
              // Predicated region
              $region55: #{_lambda_.3} parent=31 // pred_check
                _
              $region56: #{_lambda_.3} parent=31 // pred_check_branch
                %257 = sbr.rel target = $region58
              $region57: #{_lambda_.3} parent=31 // pred_region
                _
              $region58: #{_lambda_.3} parent=31 // pred_fallthru
                _
            $region32: #{_lambda_.3} parent=27 // pred_fallthru
              _
            // Predicated region
            $region33: #{_lambda_.3} parent=27 // pred_check
              _
            $region34: #{_lambda_.3} parent=27 // pred_check_branch
              %171 = sbr.rel target = $region36
            $region35: #{_lambda_.3} parent=27 // pred_region
              %s173 = ssub.s32 256, 1
              loop: start=0, step=1, limit=1
              $region37: #{_lambda_.3} parent=35 // loop_pre_header
                _
              $region38: #{_lambda_.3} parent=35 // loop_header
                %s175 = sphi 0, %s179
                %p176 = scmp.ge.s32.totalorder %s175, 1
                %s180 = sphi %s165, %s165
                %s181 = sphi %s162, %s162
              $region39: #{_lambda_.3} parent=35 // loop_header_branch
                %178 = sbr.rel (%p176) target = $region43
              $region40: #{_lambda_.3} parent=35 // loop_body
                %v182 = vld [vmem:[%s180] sm:%s173]
                %183 = vst [vmem:[%s181] sm:%s173] %v182
                %v184 = vld [vmem:[%s180 + $0x20] sm:%s173]
                %185 = vst [vmem:[%s181 + $0x8] sm:%s173] %v184
                %v186 = vld [vmem:[%s180 + $0x40] sm:%s173]
                %187 = vst [vmem:[%s181 + $0x10] sm:%s173] %v186
                %v188 = vld [vmem:[%s180 + $0x60] sm:%s173]
                %189 = vst [vmem:[%s181 + $0x18] sm:%s173] %v188
                %v190 = vld [vmem:[%s180 + $0x80] sm:%s173]
                %191 = vst [vmem:[%s181 + $0x20] sm:%s173] %v190
                %v192 = vld [vmem:[%s180 + $0xa0] sm:%s173]
                %193 = vst [vmem:[%s181 + $0x28] sm:%s173] %v192
                %v194 = vld [vmem:[%s180 + $0xc0] sm:%s173]
                %195 = vst [vmem:[%s181 + $0x30] sm:%s173] %v194
                %v196 = vld [vmem:[%s180 + $0xe0] sm:%s173]
                %197 = vst [vmem:[%s181 + $0x38] sm:%s173] %v196
                %v198 = vld [vmem:[%s180 + $0x100] sm:%s173]
                %199 = vst [vmem:[%s181 + $0x40] sm:%s173] %v198
                %v200 = vld [vmem:[%s180 + $0x120] sm:%s173]
                %201 = vst [vmem:[%s181 + $0x48] sm:%s173] %v200
                %v202 = vld [vmem:[%s180 + $0x140] sm:%s173]
                %203 = vst [vmem:[%s181 + $0x50] sm:%s173] %v202
                %v204 = vld [vmem:[%s180 + $0x160] sm:%s173]
                %205 = vst [vmem:[%s181 + $0x58] sm:%s173] %v204
                %v206 = vld [vmem:[%s180 + $0x180] sm:%s173]
                %207 = vst [vmem:[%s181 + $0x60] sm:%s173] %v206
                %v208 = vld [vmem:[%s180 + $0x1a0] sm:%s173]
                %209 = vst [vmem:[%s181 + $0x68] sm:%s173] %v208
                %v210 = vld [vmem:[%s180 + $0x1c0] sm:%s173]
                %211 = vst [vmem:[%s181 + $0x70] sm:%s173] %v210
                %v212 = vld [vmem:[%s180 + $0x1e0] sm:%s173]
                %213 = vst [vmem:[%s181 + $0x78] sm:%s173] %v212
              $region41: #{_lambda_.3} parent=35 // loop_footer
                %s179 = sadd.s32 1, %s175
              $region42: #{_lambda_.3} parent=35 // loop_footer_branch
                %174 = sbr.rel target = $region38
              $region43: #{_lambda_.3} parent=35 // loop_exit
                _
            $region36: #{_lambda_.3} parent=27 // pred_fallthru
              _
          $region28: #{_lambda_.3} parent=23 // pred_fallthru
            _
          %258 = vnop
        $region24: #{_lambda_.3} parent=15 // pred_fallthru
          _
        // Predicated region
        $region59: #{_lambda_.3} parent=15 // pred_check
          %p259 = pneg %p96
        $region60: #{_lambda_.3} parent=15 // pred_check_branch
          %261 = sbr.rel (%p259) target = $region62
        $region61: #{_lambda_.3} parent=15 // pred_region
          %s262 = smul.u32 2, %s20
          %p263 = scmp.lt.s32.totalorder %s262, 7
          %s264 = scalar_select %p263, %s262, 7
          %s265 = scalar_lea.vmem %s2, %s264
          %s266 = smul.u32 2, %s20
        $region62: #{_lambda_.3} parent=15 // pred_fallthru
          _
      $region16: #{_lambda_.3} parent=5 // pred_fallthru
        _
      %p267 = scmp.le.s32.totalorder 1, %s12
      %p268 = scmp.lt.s32.totalorder %s12, 9
      %p269 = pnand %p267, %p268
      %p270 = pneg %p269
      // Predicated region
      $region63: #{_lambda_.3} parent=5 // pred_check
        _
      $region64: #{_lambda_.3} parent=5 // pred_check_branch
        %272 = sbr.rel (%p269) target = $region66
      $region65: #{_lambda_.3} parent=5 // pred_region
        %s273 = ssub.s32 %s12, 1
        %s274 = sand.u32 %s63, 1
        %s275 = sand.u32 %s63, 1
        %s276 = smul.addr %s275, 128
        %s277 = scalar_lea.vmem [#allocation2], %s276
        // Predicated region
        $region67: #{_lambda_.3} parent=65 // pred_check
          %p278 = pneg %p76
        $region68: #{_lambda_.3} parent=65 // pred_check_branch
          %280 = sbr.rel (%p278) target = $region70
        $region69: #{_lambda_.3} parent=65 // pred_region
          _
        $region70: #{_lambda_.3} parent=65 // pred_fallthru
          _
        %p281 = scmp.lt.s32.totalorder %s21, 1
        %s282 = scalar_select %p281, %s21, 1
        %s283 = smul.addr %s282, 4
        %s284 = scalar_lea.vmem %s0, %s283
        %p285 = pneg %p50
        %p286 = pneg %p47
        %s287 = sand.u32 %s63, 1
        %s288 = sand.u32 %s63, 1
        %s289 = smul.addr %s288, 128
        %s290 = scalar_lea.vmem [#allocation2], %s289
        %p291 = pneg %p76
        %p292 = pneg %p73
        %s293 = smul.u32 2, %s22
        %p294 = scmp.lt.s32.totalorder %s293, 7
        %s295 = scalar_select %p294, %s293, 7
        %s296 = scalar_lea.vmem %s2, %s295
        %p297 = pneg %p102
        %p298 = pneg %p99
        %p299 = pneg %p130
        %p300 = pneg %p127
        %s301 = sand.u32 %s117, 1
        %s302 = scalar_lea.sflag [#allocation4], %s301
        %s303 = sand.u32 %s117, 1
        %s304 = smul.addr %s303, 16
        %s305 = scalar_lea.vmem [#allocation3], %s304
        %p306 = scmp.lt.s32.totalorder %s21, 1
        %s307 = scalar_select %p306, %s21, 1
        %s308 = smul.addr %s307, 4
        %s309 = scalar_lea.vmem %s0, %s308
        %s310 = smul.u32 2, %s22
        %s311 = smul.u32 2, %s22
        %p312 = scmp.lt.s32.totalorder %s311, 7
        %s313 = scalar_select %p312, %s311, 7
        %s314 = scalar_lea.vmem %s2, %s313
        %s315 = smul.u32 2, %s22
        %s316 = smul.u32 2, %s22
        %v317 = vld [vmem:[%s309] sm:$0xf]
        %v318 = vld [vmem:[%s277] sm:$0xff]
        %v319 = vld [vmem:[%s277 + $0x8] sm:$0xff]
        %v320 = vld [vmem:[%s277 + $0x10] sm:$0xff]
        %v321 = vld [vmem:[%s277 + $0x18] sm:$0xff]
        %v322 = vld [vmem:[%s277 + $0x20] sm:$0xff]
        %v323 = vld [vmem:[%s277 + $0x28] sm:$0xff]
        %v324 = vld [vmem:[%s277 + $0x30] sm:$0xff]
        %v325 = vld [vmem:[%s277 + $0x38] sm:$0xff]
        %v326 = vld [vmem:[%s277 + $0x40] sm:$0xff]
        %v327 = vld [vmem:[%s277 + $0x48] sm:$0xff]
        %v328 = vld [vmem:[%s277 + $0x50] sm:$0xff]
        %v329 = vld [vmem:[%s277 + $0x58] sm:$0xff]
        %v330 = vld [vmem:[%s277 + $0x60] sm:$0xff]
        %v331 = vld [vmem:[%s277 + $0x68] sm:$0xff]
        %v332 = vld [vmem:[%s277 + $0x70] sm:$0xff]
        %v333 = vld [vmem:[%s277 + $0x78] sm:$0xff]
        %v334 = vld [vmem:[%s314] sm:$0x3]
        %v336 = vperm.slane %v334, 0
        %v337 = vperm.slane %v334, 1
        %v356 = vunpack.c.l.b16 %v318
        %v357 = vunpack.c.h.b16 %v318
        %v358 = vunpack.c.l.b16 %v319
        %v359 = vunpack.c.h.b16 %v319
        %v360 = vunpack.c.l.b16 %v320
        %v361 = vunpack.c.h.b16 %v320
        %v362 = vunpack.c.l.b16 %v321
        %v363 = vunpack.c.h.b16 %v321
        %v364 = vunpack.c.l.b16 %v322
        %v365 = vunpack.c.h.b16 %v322
        %v366 = vunpack.c.l.b16 %v323
        %v367 = vunpack.c.h.b16 %v323
        %v368 = vunpack.c.l.b16 %v324
        %v369 = vunpack.c.h.b16 %v324
        %v370 = vunpack.c.l.b16 %v325
        %v371 = vunpack.c.h.b16 %v325
        %v372 = vunpack.c.l.b16 %v326
        %v373 = vunpack.c.h.b16 %v326
        %v374 = vunpack.c.l.b16 %v327
        %v375 = vunpack.c.h.b16 %v327
        %v376 = vunpack.c.l.b16 %v328
        %v377 = vunpack.c.h.b16 %v328
        %v378 = vunpack.c.l.b16 %v329
        %v379 = vunpack.c.h.b16 %v329
        %v380 = vunpack.c.l.b16 %v330
        %v381 = vunpack.c.h.b16 %v330
        %v382 = vunpack.c.l.b16 %v331
        %v383 = vunpack.c.h.b16 %v331
        %v384 = vunpack.c.l.b16 %v332
        %v385 = vunpack.c.h.b16 %v332
        %v386 = vunpack.c.l.b16 %v333
        %v387 = vunpack.c.h.b16 %v333
        %v388 = vpack.c.b16 %v358, %v356
        %v389 = vpack.c.b16 %v359, %v357
        %v390 = vpack.c.b16 %v362, %v360
        %v391 = vpack.c.b16 %v363, %v361
        %v392 = vpack.c.b16 %v366, %v364
        %v393 = vpack.c.b16 %v367, %v365
        %v394 = vpack.c.b16 %v370, %v368
        %v395 = vpack.c.b16 %v371, %v369
        %v396 = vpack.c.b16 %v374, %v372
        %v397 = vpack.c.b16 %v375, %v373
        %v398 = vpack.c.b16 %v378, %v376
        %v399 = vpack.c.b16 %v379, %v377
        %v400 = vpack.c.b16 %v382, %v380
        %v401 = vpack.c.b16 %v383, %v381
        %v402 = vpack.c.b16 %v386, %v384
        %v403 = vpack.c.b16 %v387, %v385
        %420 = vmatpush.bf16.msra.mxu0 %v402
        %421 = vmatpush.bf16.msra.mxu0 %v400
        %422 = vmatpush.bf16.msra.mxu0 %v398
        %423 = vmatpush.bf16.msra.mxu0 %v396
        %424 = vmatpush.bf16.msra.mxu0 %v394
        %425 = vmatpush.bf16.msra.mxu0 %v392
        %426 = vmatpush.bf16.msra.mxu0 %v390
        %427 = vmatpush.bf16.msra.mxu0 %v388
        %428 = vmatmul.bf16.gmra.mxu0 %v317
        %v429 = vpop.f32.mrf.mxu0
        %v430 = vadd.f32 %v336, %v429
        %v431 = vpop.f32.mrf.mxu0
        %432 = vdwg.mxu0
        %433 = vmatpush.bf16.msra.mxu0 %v403
        %434 = vmatpush.bf16.msra.mxu0 %v401
        %435 = vmatpush.bf16.msra.mxu0 %v399
        %436 = vmatpush.bf16.msra.mxu0 %v397
        %437 = vmatpush.bf16.msra.mxu0 %v395
        %438 = vmatpush.bf16.msra.mxu0 %v393
        %439 = vmatpush.bf16.msra.mxu0 %v391
        %440 = vmatpush.bf16.msra.mxu0 %v389
        %441 = vmatmul.bf16.gmra.mxu0 %v317
        %v442 = vpop.f32.mrf.mxu0
        %v443 = vadd.f32 %v337, %v442
        %v444 = vpop.f32.mrf.mxu0
        %445 = vdwg.mxu0
        %446 = vst [vmem:[%s305] sm:$0xff] %v430
        %447 = vst [vmem:[%s305 + $0x8] sm:$0xff] %v443
        %s448 = sand.u32 %s117, 1
        %s449 = scalar_lea.sflag [#allocation4], %s448
        %s450 = sand.u32 %s117, 1
        %s451 = smul.addr %s450, 16
        %s452 = scalar_lea.vmem [#allocation3], %s451
        // Predicated region
        $region71: #{_lambda_.3} parent=65 // pred_check
          %p453 = pneg %p127
        $region72: #{_lambda_.3} parent=65 // pred_check_branch
          %455 = sbr.rel (%p453) target = $region74
        $region73: #{_lambda_.3} parent=65 // pred_region
          %s456 = smul.u32 2, %s22
          %458 = vsyncadd %s449, 0
          %s459 = smul.addr %s21, 8
          %s460 = sadd.s32 %s456, %s459
          %s461 = smul.addr %s460, 8
          %s462 = scalar_lea.hbm %s3, %s461
          %s464 = sshll.u32 %s452, 4
          %s465 = int_to_ptr.vmem [resolvable:$true] %s464
          %s466 = sshll.u32 %s462, 4
          %s467 = int_to_ptr.hbm [resolvable:$true] %s466
          %469 = dma.vmem_to_hbm [thread:$0]  %s465, 256, %s467, %s449
        $region74: #{_lambda_.3} parent=65 // pred_fallthru
          _
      $region66: #{_lambda_.3} parent=5 // pred_fallthru
        _
      %p470 = scmp.le.s32.totalorder 2, %s12
      // Predicated region
      $region75: #{_lambda_.3} parent=5 // pred_check
        %p471 = pneg %p470
      $region76: #{_lambda_.3} parent=5 // pred_check_branch
        %473 = sbr.rel (%p471) target = $region78
      $region77: #{_lambda_.3} parent=5 // pred_region
        %s474 = ssub.s32 %s12, 2
        // Predicated region
        $region79: #{_lambda_.3} parent=77 // pred_check
          %p475 = pneg %p133
        $region80: #{_lambda_.3} parent=77 // pred_check_branch
          %477 = sbr.rel (%p475) target = $region82
        $region81: #{_lambda_.3} parent=77 // pred_region
          %s478 = sand.u32 %s118, 1
          %s479 = scalar_lea.sflag [#allocation4], %s478
          %s480 = sand.u32 %s118, 1
          %s481 = smul.addr %s480, 16
          %s482 = scalar_lea.vmem [#allocation3], %s481
          %484 = dma.done %s479, 256
        $region82: #{_lambda_.3} parent=77 // pred_fallthru
          _
      $region78: #{_lambda_.3} parent=5 // pred_fallthru
        _
    $region6: #{_lambda_.3} parent=1 // loop_footer
      %s16 = sadd.s32 1, %s12
    $region7: #{_lambda_.3} parent=1 // loop_footer_branch
      %11 = sbr.rel target = $region3
    $region8: #{_lambda_.3} parent=1 // loop_exit
      _
    %485 = vsyncpa [#allocation4], 1
    %s486 = scalar_lea.sflag [#allocation4], 1
    %487 = vsyncpa %s486, 1

</llo_original>
